<compile_context>
chip_gen: v7x
topology: tpu7x:2x2x1
jax: 0.10.0
libtpu: 0.0.40
codegen_flags: <defaults>
</compile_context>

<pallas_src>
import functools

import jax
import jax.numpy as jnp
from jax.experimental import pallas as pl
from jax.experimental.pallas import tpu as pltpu


def dp_fea_kernel(x_ref, w_ref, b_ref, o_ref, *,
                  H, W, Cin, Cout, gamma, pad_flat):
    """Fused DP_Fea for one batch element.

    x_ref: (1, Cin, L)          flat-padded input, L = H*W + 2*pad_flat
    w_ref: (Ctot, 9*Cin)        packed weights, Ctot = (gamma+1)*Cout
                                row block i*Cout:(i+1)*Cout = branch i,
                                column (kh*3+kw)*Cin + ci
    b_ref: (Ctot, 1)            biases (f32)
    o_ref: (1, Ctot, H*W)       output, channel-major, lane-dense spatial
    """
    HW = H * W
    # lane index -> w coordinate (for masking the row-wrap of horizontal taps)
    w_idx = jax.lax.broadcasted_iota(jnp.int32, (1, HW), 1) % W

    branch_outs = []
    for i in range(gamma + 1):
        d = 2 ** i
        cols = []
        for kh in range(3):
            for kw in range(3):
                dh = (kh - 1) * d
                dw = (kw - 1) * d
                base = pad_flat + dh * W + dw          # static Python int
                slab = x_ref[0, :, base:base + HW]     # (Cin, HW)
                # Zero the lanes whose w+dw falls outside [0, W): in the flat
                # layout those positions wrapped into the neighbouring row.
                if dw > 0:
                    slab = jnp.where(w_idx < W - dw, slab, 0)
                elif dw < 0:
                    slab = jnp.where(w_idx >= -dw, slab, 0)
                cols.append(slab)
        col = jnp.concatenate(cols, axis=0)            # (9*Cin, HW)
        w_i = w_ref[i * Cout:(i + 1) * Cout, :]        # (Cout, 9*Cin)
        acc = jnp.dot(w_i, col,
                      preferred_element_type=jnp.float32)  # (Cout, HW) f32
        acc = acc + b_ref[i * Cout:(i + 1) * Cout, :]  # bias bcast over lanes
        if i == 0:
            acc = jnp.maximum(acc, 0.0)                # ReLU only on branch 0
        branch_outs.append(acc)

    o_ref[0, :, :] = jnp.concatenate(branch_outs, axis=0).astype(o_ref.dtype)


def dp_fea_forward(x_nchw, weights, biases, gamma=3,
                   compute_dtype=jnp.bfloat16):
    """Pallas implementation of DP_Fea.forward.

    x_nchw:  (N, Cin, H, W) float32
    weights: list of (3, 3, Cin, Cout) HWIO weights, one per dilation 2**i
    biases:  list of (Cout,) biases
    returns: (N, (gamma+1)*Cout, H, W) float32 (NCHW, like PyTorch)
    """
    N, Cin, H, W = x_nchw.shape
    Cout = weights[0].shape[-1]
    Ctot = (gamma + 1) * Cout
    HW = H * W
    max_pad = 2 ** gamma
    pad_flat = max_pad * W + max_pad          # covers dh in [-max_pad, max_pad]
    L = HW + 2 * pad_flat

    # Flatten spatial (free, contiguous) and pad once along the flat axis.
    x_flat = x_nchw.reshape(N, Cin, HW).astype(compute_dtype)
    x_flat = jnp.pad(x_flat, ((0, 0), (0, 0), (pad_flat, pad_flat)))

    # Pack weights once in the wrapper: (3,3,Cin,Cout) -> (Cout, 9*Cin),
    # stacked over branches -> (Ctot, 9*Cin).  Lane-friendly, matches the
    # single-matmul im2col formulation.
    w_all = jnp.concatenate(
        [jnp.transpose(w, (3, 0, 1, 2)).reshape(Cout, 9 * Cin)
         for w in weights], axis=0).astype(compute_dtype)
    b_all = jnp.concatenate(biases).reshape(Ctot, 1).astype(jnp.float32)

    kern = functools.partial(
        dp_fea_kernel,
        H=H, W=W, Cin=Cin, Cout=Cout, gamma=gamma, pad_flat=pad_flat)

    out = pl.pallas_call(
        kern,
        out_shape=jax.ShapeDtypeStruct((N, Ctot, HW), jnp.float32),
        grid=(N,),
        in_specs=[
            pl.BlockSpec((1, Cin, L), lambda n: (n, 0, 0)),
            pl.BlockSpec((Ctot, 9 * Cin), lambda n: (0, 0)),
            pl.BlockSpec((Ctot, 1), lambda n: (0, 0)),
        ],
        out_specs=pl.BlockSpec((1, Ctot, HW), lambda n: (n, 0, 0)),
        compiler_params=pltpu.CompilerParams(
            dimension_semantics=("parallel",)),
    )(x_flat, w_all, b_all)

    # Free reshape back to NCHW (channel-major data already in place).
    return out.reshape(N, Ctot, H, W)


def dp_fea_reference(x_nchw, weights, biases, gamma=3):
    """Pure-JAX f32 reference (lax conv) mirroring the PyTorch forward."""
    outs = []
    for i in range(gamma + 1):
        d = 2 ** i
        w_oihw = jnp.transpose(weights[i], (3, 2, 0, 1))
        y = jax.lax.conv_general_dilated(
            x_nchw, w_oihw,
            window_strides=(1, 1),
            padding=[(d, d), (d, d)],
            rhs_dilation=(d, d),
            dimension_numbers=("NCHW", "OIHW", "NCHW"),
            precision=jax.lax.Precision.HIGHEST)
        y = y + biases[i].reshape(1, -1, 1, 1)
        if i == 0:
            y = jnp.maximum(y, 0.0)
        outs.append(y)
    return jnp.concatenate(outs, axis=1)


if __name__ == "__main__":
    # Small shapes consistent with the module (in_channel, depth shrunk).
    N, Cin, H, W = 2, 8, 16, 16
    depth, gamma = 8, 3

    key = jax.random.PRNGKey(0)
    kx, kw = jax.random.split(key)
    x = jax.random.normal(kx, (N, Cin, H, W), dtype=jnp.float32)

    weights, biases = [], []
    wkeys = jax.random.split(kw, 2 * (gamma + 1))
    bound = 1.0 / (Cin * 3 * 3) ** 0.5
    for i in range(gamma + 1):
        weights.append(jax.random.uniform(
            wkeys[2 * i], (3, 3, Cin, depth),
            minval=-bound, maxval=bound, dtype=jnp.float32))
        biases.append(jax.random.uniform(
            wkeys[2 * i + 1], (depth,),
            minval=-bound, maxval=bound, dtype=jnp.float32))

    out = jax.block_until_ready(dp_fea_forward(x, weights, biases, gamma))
    ref = jax.block_until_ready(dp_fea_reference(x, weights, biases, gamma))

    assert out.shape == (N, (gamma + 1) * depth, H, W), out.shape
    # bf16 matmul operands (f32 accumulation) -> loosened tolerance; any
    # structural bug (wrong tap offset / mask / packing) gives errors >> 0.1.
    assert jnp.allclose(out, ref, rtol=3e-2, atol=3e-2), float(
        jnp.max(jnp.abs(out - ref)))
    print("KERNEL_OK")
</pallas_src>

<mosaic_0001>
module attributes {stable_mosaic.version = 11 : i64} {
  func.func @dp_fea_kernel(%arg0: i32, %arg1: memref<1x8x528xbf16, #tpu.memory_space<vmem>>, %arg2: memref<32x72xbf16, #tpu.memory_space<vmem>>, %arg3: memref<32x1xf32, #tpu.memory_space<vmem>>, %arg4: memref<1x32x256xf32, #tpu.memory_space<vmem>>) attributes {dimension_semantics = [#tpu.dimension_semantics<parallel>], iteration_bounds = array<i64: 2>, scalar_prefetch = 0 : i64, scratch_operands = 0 : i64, tpu.core_type = #tpu.core_type<tc>, window_params = [{transform_indices = @transform_0, window_bounds = array<i64: 1, 8, 528>}, {pipeline_mode = #tpu.pipeline_mode<synchronous>, transform_indices = @transform_1, window_bounds = array<i64: 32, 72>}, {pipeline_mode = #tpu.pipeline_mode<synchronous>, transform_indices = @transform_2, window_bounds = array<i64: 32, 1>}, {transform_indices = @transform_3, window_bounds = array<i64: 1, 32, 256>}]} {
    %0 = tpu.iota {dimensions = array<i32: 1>} : vector<1x256xi32>
    %c16_i32 = arith.constant 16 : i32
    %c0_i32 = arith.constant 0 : i32
    %1 = arith.cmpi eq, %c16_i32, %c0_i32 : i32
    %c1_i32 = arith.constant 1 : i32
    %2 = arith.select %1, %c1_i32, %c16_i32 : i32
    %3 = vector.broadcast %2 : i32 to vector<1x256xi32>
    %4 = arith.remsi %0, %3 : vector<1x256xi32>
    %c0_i32_0 = arith.constant 0 : i32
    %5 = vector.broadcast %c0_i32_0 : i32 to vector<1x256xi32>
    %6 = arith.cmpi ne, %4, %5 : vector<1x256xi32>
    %c0_i32_1 = arith.constant 0 : i32
    %7 = vector.broadcast %c0_i32_1 : i32 to vector<1x256xi32>
    %8 = arith.cmpi slt, %4, %7 : vector<1x256xi32>
    %c0_i32_2 = arith.constant 0 : i32
    %9 = arith.cmpi slt, %2, %c0_i32_2 : i32
    %10 = vector.broadcast %9 : i1 to vector<1x256xi1>
    %11 = vector.broadcast %10 : vector<1x256xi1> to vector<1x256xi1>
    %12 = arith.xori %8, %11 : vector<1x256xi1>
    %13 = arith.andi %12, %6 : vector<1x256xi1>
    %14 = vector.broadcast %2 : i32 to vector<1x256xi32>
    %15 = arith.addi %4, %14 : vector<1x256xi32>
    %16 = arith.select %13, %15, %4 : vector<1x256xi1>, vector<1x256xi32>
    %c0 = arith.constant 0 : index
    %c0_3 = arith.constant 0 : index
    %c119 = arith.constant 119 : index
    %17 = vector.load %arg1[%c0, %c0_3, %c119] : memref<1x8x528xbf16, #tpu.memory_space<vmem>>, vector<1x8x256xbf16>
    %18 = vector.shape_cast %17 : vector<1x8x256xbf16> to vector<8x256xbf16>
    %c1_i32_4 = arith.constant 1 : i32
    %19 = vector.broadcast %c1_i32_4 : i32 to vector<1x256xi32>
    %20 = arith.cmpi sge, %16, %19 : vector<1x256xi32>
    %c0_i32_5 = arith.constant 0 : i32
    %21 = arith.sitofp %c0_i32_5 : i32 to bf16
    %22 = vector.shape_cast %20 : vector<1x256xi1> to vector<1x256xi1>
    %23 = vector.broadcast %22 : vector<1x256xi1> to vector<8x256xi1>
    %24 = vector.broadcast %21 : bf16 to vector<8x256xbf16>
    %25 = arith.select %23, %18, %24 : vector<8x256xi1>, vector<8x256xbf16>
    %c0_6 = arith.constant 0 : index
    %c0_7 = arith.constant 0 : index
    %c120 = arith.constant 120 : index
    %26 = vector.load %arg1[%c0_6, %c0_7, %c120] : memref<1x8x528xbf16, #tpu.memory_space<vmem>>, vector<1x8x256xbf16>
    %27 = vector.shape_cast %26 : vector<1x8x256xbf16> to vector<8x256xbf16>
    %c0_8 = arith.constant 0 : index
    %c0_9 = arith.constant 0 : index
    %c121 = arith.constant 121 : index
    %28 = vector.load %arg1[%c0_8, %c0_9, %c121] : memref<1x8x528xbf16, #tpu.memory_space<vmem>>, vector<1x8x256xbf16>
    %29 = vector.shape_cast %28 : vector<1x8x256xbf16> to vector<8x256xbf16>
    %c15_i32 = arith.constant 15 : i32
    %30 = vector.broadcast %c15_i32 : i32 to vector<1x256xi32>
    %31 = arith.cmpi slt, %16, %30 : vector<1x256xi32>
    %c0_i32_10 = arith.constant 0 : i32
    %32 = arith.sitofp %c0_i32_10 : i32 to bf16
    %33 = vector.shape_cast %31 : vector<1x256xi1> to vector<1x256xi1>
    %34 = vector.broadcast %33 : vector<1x256xi1> to vector<8x256xi1>
    %35 = vector.broadcast %32 : bf16 to vector<8x256xbf16>
    %36 = arith.select %34, %29, %35 : vector<8x256xi1>, vector<8x256xbf16>
    %c0_11 = arith.constant 0 : index
    %c0_12 = arith.constant 0 : index
    %c135 = arith.constant 135 : index
    %37 = vector.load %arg1[%c0_11, %c0_12, %c135] : memref<1x8x528xbf16, #tpu.memory_space<vmem>>, vector<1x8x256xbf16>
    %38 = vector.shape_cast %37 : vector<1x8x256xbf16> to vector<8x256xbf16>
    %c1_i32_13 = arith.constant 1 : i32
    %39 = vector.broadcast %c1_i32_13 : i32 to vector<1x256xi32>
    %40 = arith.cmpi sge, %16, %39 : vector<1x256xi32>
    %c0_i32_14 = arith.constant 0 : i32
    %41 = arith.sitofp %c0_i32_14 : i32 to bf16
    %42 = vector.shape_cast %40 : vector<1x256xi1> to vector<1x256xi1>
    %43 = vector.broadcast %42 : vector<1x256xi1> to vector<8x256xi1>
    %44 = vector.broadcast %41 : bf16 to vector<8x256xbf16>
    %45 = arith.select %43, %38, %44 : vector<8x256xi1>, vector<8x256xbf16>
    %c0_15 = arith.constant 0 : index
    %c0_16 = arith.constant 0 : index
    %c136 = arith.constant 136 : index
    %46 = vector.load %arg1[%c0_15, %c0_16, %c136] : memref<1x8x528xbf16, #tpu.memory_space<vmem>>, vector<1x8x256xbf16>
    %47 = vector.shape_cast %46 : vector<1x8x256xbf16> to vector<8x256xbf16>
    %c0_17 = arith.constant 0 : index
    %c0_18 = arith.constant 0 : index
    %c137 = arith.constant 137 : index
    %48 = vector.load %arg1[%c0_17, %c0_18, %c137] : memref<1x8x528xbf16, #tpu.memory_space<vmem>>, vector<1x8x256xbf16>
    %49 = vector.shape_cast %48 : vector<1x8x256xbf16> to vector<8x256xbf16>
    %c15_i32_19 = arith.constant 15 : i32
    %50 = vector.broadcast %c15_i32_19 : i32 to vector<1x256xi32>
    %51 = arith.cmpi slt, %16, %50 : vector<1x256xi32>
    %c0_i32_20 = arith.constant 0 : i32
    %52 = arith.sitofp %c0_i32_20 : i32 to bf16
    %53 = vector.shape_cast %51 : vector<1x256xi1> to vector<1x256xi1>
    %54 = vector.broadcast %53 : vector<1x256xi1> to vector<8x256xi1>
    %55 = vector.broadcast %52 : bf16 to vector<8x256xbf16>
    %56 = arith.select %54, %49, %55 : vector<8x256xi1>, vector<8x256xbf16>
    %c0_21 = arith.constant 0 : index
    %c0_22 = arith.constant 0 : index
    %c151 = arith.constant 151 : index
    %57 = vector.load %arg1[%c0_21, %c0_22, %c151] : memref<1x8x528xbf16, #tpu.memory_space<vmem>>, vector<1x8x256xbf16>
    %58 = vector.shape_cast %57 : vector<1x8x256xbf16> to vector<8x256xbf16>
    %c1_i32_23 = arith.constant 1 : i32
    %59 = vector.broadcast %c1_i32_23 : i32 to vector<1x256xi32>
    %60 = arith.cmpi sge, %16, %59 : vector<1x256xi32>
    %c0_i32_24 = arith.constant 0 : i32
    %61 = arith.sitofp %c0_i32_24 : i32 to bf16
    %62 = vector.shape_cast %60 : vector<1x256xi1> to vector<1x256xi1>
    %63 = vector.broadcast %62 : vector<1x256xi1> to vector<8x256xi1>
    %64 = vector.broadcast %61 : bf16 to vector<8x256xbf16>
    %65 = arith.select %63, %58, %64 : vector<8x256xi1>, vector<8x256xbf16>
    %c0_25 = arith.constant 0 : index
    %c0_26 = arith.constant 0 : index
    %c152 = arith.constant 152 : index
    %66 = vector.load %arg1[%c0_25, %c0_26, %c152] : memref<1x8x528xbf16, #tpu.memory_space<vmem>>, vector<1x8x256xbf16>
    %67 = vector.shape_cast %66 : vector<1x8x256xbf16> to vector<8x256xbf16>
    %c0_27 = arith.constant 0 : index
    %c0_28 = arith.constant 0 : index
    %c153 = arith.constant 153 : index
    %68 = vector.load %arg1[%c0_27, %c0_28, %c153] : memref<1x8x528xbf16, #tpu.memory_space<vmem>>, vector<1x8x256xbf16>
    %69 = vector.shape_cast %68 : vector<1x8x256xbf16> to vector<8x256xbf16>
    %c15_i32_29 = arith.constant 15 : i32
    %70 = vector.broadcast %c15_i32_29 : i32 to vector<1x256xi32>
    %71 = arith.cmpi slt, %16, %70 : vector<1x256xi32>
    %c0_i32_30 = arith.constant 0 : i32
    %72 = arith.sitofp %c0_i32_30 : i32 to bf16
    %73 = vector.shape_cast %71 : vector<1x256xi1> to vector<1x256xi1>
    %74 = vector.broadcast %73 : vector<1x256xi1> to vector<8x256xi1>
    %75 = vector.broadcast %72 : bf16 to vector<8x256xbf16>
    %76 = arith.select %74, %69, %75 : vector<8x256xi1>, vector<8x256xbf16>
    %77 = tpu.concatenate %25, %27, %36, %45, %47, %56, %65, %67, %76 in 0 : vector<8x256xbf16>, vector<8x256xbf16>, vector<8x256xbf16>, vector<8x256xbf16>, vector<8x256xbf16>, vector<8x256xbf16>, vector<8x256xbf16>, vector<8x256xbf16>, vector<8x256xbf16> -> vector<72x256xbf16>
    %c0_31 = arith.constant 0 : index
    %c0_32 = arith.constant 0 : index
    %78 = vector.load %arg2[%c0_31, %c0_32] : memref<32x72xbf16, #tpu.memory_space<vmem>>, vector<8x72xbf16>
    %cst = arith.constant dense<0.000000e+00> : vector<8x256xf32>
    %79 = tpu.matmul %78, %77, %cst {dimension_numbers = #tpu.dot_dimension_numbers<[1], [0], [0], [1], [0, 0, 1, 1], [], []>} : vector<8x72xbf16>, vector<72x256xbf16>, vector<8x256xf32> -> vector<8x256xf32>
    %c0_33 = arith.constant 0 : index
    %c0_34 = arith.constant 0 : index
    %80 = vector.load %arg3[%c0_33, %c0_34] : memref<32x1xf32, #tpu.memory_space<vmem>>, vector<8x1xf32>
    %81 = vector.broadcast %80 : vector<8x1xf32> to vector<8x256xf32>
    %82 = arith.addf %79, %81 : vector<8x256xf32>
    %cst_35 = arith.constant 0.000000e+00 : f32
    %83 = vector.broadcast %cst_35 : f32 to vector<8x256xf32>
    %84 = arith.maximumf %82, %83 : vector<8x256xf32>
    %c0_36 = arith.constant 0 : index
    %c0_37 = arith.constant 0 : index
    %c102 = arith.constant 102 : index
    %85 = vector.load %arg1[%c0_36, %c0_37, %c102] : memref<1x8x528xbf16, #tpu.memory_space<vmem>>, vector<1x8x256xbf16>
    %86 = vector.shape_cast %85 : vector<1x8x256xbf16> to vector<8x256xbf16>
    %c2_i32 = arith.constant 2 : i32
    %87 = vector.broadcast %c2_i32 : i32 to vector<1x256xi32>
    %88 = arith.cmpi sge, %16, %87 : vector<1x256xi32>
    %c0_i32_38 = arith.constant 0 : i32
    %89 = arith.sitofp %c0_i32_38 : i32 to bf16
    %90 = vector.shape_cast %88 : vector<1x256xi1> to vector<1x256xi1>
    %91 = vector.broadcast %90 : vector<1x256xi1> to vector<8x256xi1>
    %92 = vector.broadcast %89 : bf16 to vector<8x256xbf16>
    %93 = arith.select %91, %86, %92 : vector<8x256xi1>, vector<8x256xbf16>
    %c0_39 = arith.constant 0 : index
    %c0_40 = arith.constant 0 : index
    %c104 = arith.constant 104 : index
    %94 = vector.load %arg1[%c0_39, %c0_40, %c104] : memref<1x8x528xbf16, #tpu.memory_space<vmem>>, vector<1x8x256xbf16>
    %95 = vector.shape_cast %94 : vector<1x8x256xbf16> to vector<8x256xbf16>
    %c0_41 = arith.constant 0 : index
    %c0_42 = arith.constant 0 : index
    %c106 = arith.constant 106 : index
    %96 = vector.load %arg1[%c0_41, %c0_42, %c106] : memref<1x8x528xbf16, #tpu.memory_space<vmem>>, vector<1x8x256xbf16>
    %97 = vector.shape_cast %96 : vector<1x8x256xbf16> to vector<8x256xbf16>
    %c14_i32 = arith.constant 14 : i32
    %98 = vector.broadcast %c14_i32 : i32 to vector<1x256xi32>
    %99 = arith.cmpi slt, %16, %98 : vector<1x256xi32>
    %c0_i32_43 = arith.constant 0 : i32
    %100 = arith.sitofp %c0_i32_43 : i32 to bf16
    %101 = vector.shape_cast %99 : vector<1x256xi1> to vector<1x256xi1>
    %102 = vector.broadcast %101 : vector<1x256xi1> to vector<8x256xi1>
    %103 = vector.broadcast %100 : bf16 to vector<8x256xbf16>
    %104 = arith.select %102, %97, %103 : vector<8x256xi1>, vector<8x256xbf16>
    %c0_44 = arith.constant 0 : index
    %c0_45 = arith.constant 0 : index
    %c134 = arith.constant 134 : index
    %105 = vector.load %arg1[%c0_44, %c0_45, %c134] : memref<1x8x528xbf16, #tpu.memory_space<vmem>>, vector<1x8x256xbf16>
    %106 = vector.shape_cast %105 : vector<1x8x256xbf16> to vector<8x256xbf16>
    %c2_i32_46 = arith.constant 2 : i32
    %107 = vector.broadcast %c2_i32_46 : i32 to vector<1x256xi32>
    %108 = arith.cmpi sge, %16, %107 : vector<1x256xi32>
    %c0_i32_47 = arith.constant 0 : i32
    %109 = arith.sitofp %c0_i32_47 : i32 to bf16
    %110 = vector.shape_cast %108 : vector<1x256xi1> to vector<1x256xi1>
    %111 = vector.broadcast %110 : vector<1x256xi1> to vector<8x256xi1>
    %112 = vector.broadcast %109 : bf16 to vector<8x256xbf16>
    %113 = arith.select %111, %106, %112 : vector<8x256xi1>, vector<8x256xbf16>
    %c0_48 = arith.constant 0 : index
    %c0_49 = arith.constant 0 : index
    %c136_50 = arith.constant 136 : index
    %114 = vector.load %arg1[%c0_48, %c0_49, %c136_50] : memref<1x8x528xbf16, #tpu.memory_space<vmem>>, vector<1x8x256xbf16>
    %115 = vector.shape_cast %114 : vector<1x8x256xbf16> to vector<8x256xbf16>
    %c0_51 = arith.constant 0 : index
    %c0_52 = arith.constant 0 : index
    %c138 = arith.constant 138 : index
    %116 = vector.load %arg1[%c0_51, %c0_52, %c138] : memref<1x8x528xbf16, #tpu.memory_space<vmem>>, vector<1x8x256xbf16>
    %117 = vector.shape_cast %116 : vector<1x8x256xbf16> to vector<8x256xbf16>
    %c14_i32_53 = arith.constant 14 : i32
    %118 = vector.broadcast %c14_i32_53 : i32 to vector<1x256xi32>
    %119 = arith.cmpi slt, %16, %118 : vector<1x256xi32>
    %c0_i32_54 = arith.constant 0 : i32
    %120 = arith.sitofp %c0_i32_54 : i32 to bf16
    %121 = vector.shape_cast %119 : vector<1x256xi1> to vector<1x256xi1>
    %122 = vector.broadcast %121 : vector<1x256xi1> to vector<8x256xi1>
    %123 = vector.broadcast %120 : bf16 to vector<8x256xbf16>
    %124 = arith.select %122, %117, %123 : vector<8x256xi1>, vector<8x256xbf16>
    %c0_55 = arith.constant 0 : index
    %c0_56 = arith.constant 0 : index
    %c166 = arith.constant 166 : index
    %125 = vector.load %arg1[%c0_55, %c0_56, %c166] : memref<1x8x528xbf16, #tpu.memory_space<vmem>>, vector<1x8x256xbf16>
    %126 = vector.shape_cast %125 : vector<1x8x256xbf16> to vector<8x256xbf16>
    %c2_i32_57 = arith.constant 2 : i32
    %127 = vector.broadcast %c2_i32_57 : i32 to vector<1x256xi32>
    %128 = arith.cmpi sge, %16, %127 : vector<1x256xi32>
    %c0_i32_58 = arith.constant 0 : i32
    %129 = arith.sitofp %c0_i32_58 : i32 to bf16
    %130 = vector.shape_cast %128 : vector<1x256xi1> to vector<1x256xi1>
    %131 = vector.broadcast %130 : vector<1x256xi1> to vector<8x256xi1>
    %132 = vector.broadcast %129 : bf16 to vector<8x256xbf16>
    %133 = arith.select %131, %126, %132 : vector<8x256xi1>, vector<8x256xbf16>
    %c0_59 = arith.constant 0 : index
    %c0_60 = arith.constant 0 : index
    %c168 = arith.constant 168 : index
    %134 = vector.load %arg1[%c0_59, %c0_60, %c168] : memref<1x8x528xbf16, #tpu.memory_space<vmem>>, vector<1x8x256xbf16>
    %135 = vector.shape_cast %134 : vector<1x8x256xbf16> to vector<8x256xbf16>
    %c0_61 = arith.constant 0 : index
    %c0_62 = arith.constant 0 : index
    %c170 = arith.constant 170 : index
    %136 = vector.load %arg1[%c0_61, %c0_62, %c170] : memref<1x8x528xbf16, #tpu.memory_space<vmem>>, vector<1x8x256xbf16>
    %137 = vector.shape_cast %136 : vector<1x8x256xbf16> to vector<8x256xbf16>
    %c14_i32_63 = arith.constant 14 : i32
    %138 = vector.broadcast %c14_i32_63 : i32 to vector<1x256xi32>
    %139 = arith.cmpi slt, %16, %138 : vector<1x256xi32>
    %c0_i32_64 = arith.constant 0 : i32
    %140 = arith.sitofp %c0_i32_64 : i32 to bf16
    %141 = vector.shape_cast %139 : vector<1x256xi1> to vector<1x256xi1>
    %142 = vector.broadcast %141 : vector<1x256xi1> to vector<8x256xi1>
    %143 = vector.broadcast %140 : bf16 to vector<8x256xbf16>
    %144 = arith.select %142, %137, %143 : vector<8x256xi1>, vector<8x256xbf16>
    %145 = tpu.concatenate %93, %95, %104, %113, %115, %124, %133, %135, %144 in 0 : vector<8x256xbf16>, vector<8x256xbf16>, vector<8x256xbf16>, vector<8x256xbf16>, vector<8x256xbf16>, vector<8x256xbf16>, vector<8x256xbf16>, vector<8x256xbf16>, vector<8x256xbf16> -> vector<72x256xbf16>
    %c8 = arith.constant 8 : index
    %c0_65 = arith.constant 0 : index
    %146 = vector.load %arg2[%c8, %c0_65] : memref<32x72xbf16, #tpu.memory_space<vmem>>, vector<8x72xbf16>
    %cst_66 = arith.constant dense<0.000000e+00> : vector<8x256xf32>
    %147 = tpu.matmul %146, %145, %cst_66 {dimension_numbers = #tpu.dot_dimension_numbers<[1], [0], [0], [1], [0, 0, 1, 1], [], []>} : vector<8x72xbf16>, vector<72x256xbf16>, vector<8x256xf32> -> vector<8x256xf32>
    %c8_67 = arith.constant 8 : index
    %c0_68 = arith.constant 0 : index
    %148 = vector.load %arg3[%c8_67, %c0_68] : memref<32x1xf32, #tpu.memory_space<vmem>>, vector<8x1xf32>
    %149 = vector.broadcast %148 : vector<8x1xf32> to vector<8x256xf32>
    %150 = arith.addf %147, %149 : vector<8x256xf32>
    %c0_69 = arith.constant 0 : index
    %c0_70 = arith.constant 0 : index
    %c68 = arith.constant 68 : index
    %151 = vector.load %arg1[%c0_69, %c0_70, %c68] : memref<1x8x528xbf16, #tpu.memory_space<vmem>>, vector<1x8x256xbf16>
    %152 = vector.shape_cast %151 : vector<1x8x256xbf16> to vector<8x256xbf16>
    %c4_i32 = arith.constant 4 : i32
    %153 = vector.broadcast %c4_i32 : i32 to vector<1x256xi32>
    %154 = arith.cmpi sge, %16, %153 : vector<1x256xi32>
    %c0_i32_71 = arith.constant 0 : i32
    %155 = arith.sitofp %c0_i32_71 : i32 to bf16
    %156 = vector.shape_cast %154 : vector<1x256xi1> to vector<1x256xi1>
    %157 = vector.broadcast %156 : vector<1x256xi1> to vector<8x256xi1>
    %158 = vector.broadcast %155 : bf16 to vector<8x256xbf16>
    %159 = arith.select %157, %152, %158 : vector<8x256xi1>, vector<8x256xbf16>
    %c0_72 = arith.constant 0 : index
    %c0_73 = arith.constant 0 : index
    %c72 = arith.constant 72 : index
    %160 = vector.load %arg1[%c0_72, %c0_73, %c72] : memref<1x8x528xbf16, #tpu.memory_space<vmem>>, vector<1x8x256xbf16>
    %161 = vector.shape_cast %160 : vector<1x8x256xbf16> to vector<8x256xbf16>
    %c0_74 = arith.constant 0 : index
    %c0_75 = arith.constant 0 : index
    %c76 = arith.constant 76 : index
    %162 = vector.load %arg1[%c0_74, %c0_75, %c76] : memref<1x8x528xbf16, #tpu.memory_space<vmem>>, vector<1x8x256xbf16>
    %163 = vector.shape_cast %162 : vector<1x8x256xbf16> to vector<8x256xbf16>
    %c12_i32 = arith.constant 12 : i32
    %164 = vector.broadcast %c12_i32 : i32 to vector<1x256xi32>
    %165 = arith.cmpi slt, %16, %164 : vector<1x256xi32>
    %c0_i32_76 = arith.constant 0 : i32
    %166 = arith.sitofp %c0_i32_76 : i32 to bf16
    %167 = vector.shape_cast %165 : vector<1x256xi1> to vector<1x256xi1>
    %168 = vector.broadcast %167 : vector<1x256xi1> to vector<8x256xi1>
    %169 = vector.broadcast %166 : bf16 to vector<8x256xbf16>
    %170 = arith.select %168, %163, %169 : vector<8x256xi1>, vector<8x256xbf16>
    %c0_77 = arith.constant 0 : index
    %c0_78 = arith.constant 0 : index
    %c132 = arith.constant 132 : index
    %171 = vector.load %arg1[%c0_77, %c0_78, %c132] : memref<1x8x528xbf16, #tpu.memory_space<vmem>>, vector<1x8x256xbf16>
    %172 = vector.shape_cast %171 : vector<1x8x256xbf16> to vector<8x256xbf16>
    %c4_i32_79 = arith.constant 4 : i32
    %173 = vector.broadcast %c4_i32_79 : i32 to vector<1x256xi32>
    %174 = arith.cmpi sge, %16, %173 : vector<1x256xi32>
    %c0_i32_80 = arith.constant 0 : i32
    %175 = arith.sitofp %c0_i32_80 : i32 to bf16
    %176 = vector.shape_cast %174 : vector<1x256xi1> to vector<1x256xi1>
    %177 = vector.broadcast %176 : vector<1x256xi1> to vector<8x256xi1>
    %178 = vector.broadcast %175 : bf16 to vector<8x256xbf16>
    %179 = arith.select %177, %172, %178 : vector<8x256xi1>, vector<8x256xbf16>
    %c0_81 = arith.constant 0 : index
    %c0_82 = arith.constant 0 : index
    %c136_83 = arith.constant 136 : index
    %180 = vector.load %arg1[%c0_81, %c0_82, %c136_83] : memref<1x8x528xbf16, #tpu.memory_space<vmem>>, vector<1x8x256xbf16>
    %181 = vector.shape_cast %180 : vector<1x8x256xbf16> to vector<8x256xbf16>
    %c0_84 = arith.constant 0 : index
    %c0_85 = arith.constant 0 : index
    %c140 = arith.constant 140 : index
    %182 = vector.load %arg1[%c0_84, %c0_85, %c140] : memref<1x8x528xbf16, #tpu.memory_space<vmem>>, vector<1x8x256xbf16>
    %183 = vector.shape_cast %182 : vector<1x8x256xbf16> to vector<8x256xbf16>
    %c12_i32_86 = arith.constant 12 : i32
    %184 = vector.broadcast %c12_i32_86 : i32 to vector<1x256xi32>
    %185 = arith.cmpi slt, %16, %184 : vector<1x256xi32>
    %c0_i32_87 = arith.constant 0 : i32
    %186 = arith.sitofp %c0_i32_87 : i32 to bf16
    %187 = vector.shape_cast %185 : vector<1x256xi1> to vector<1x256xi1>
    %188 = vector.broadcast %187 : vector<1x256xi1> to vector<8x256xi1>
    %189 = vector.broadcast %186 : bf16 to vector<8x256xbf16>
    %190 = arith.select %188, %183, %189 : vector<8x256xi1>, vector<8x256xbf16>
    %c0_88 = arith.constant 0 : index
    %c0_89 = arith.constant 0 : index
    %c196 = arith.constant 196 : index
    %191 = vector.load %arg1[%c0_88, %c0_89, %c196] : memref<1x8x528xbf16, #tpu.memory_space<vmem>>, vector<1x8x256xbf16>
    %192 = vector.shape_cast %191 : vector<1x8x256xbf16> to vector<8x256xbf16>
    %c4_i32_90 = arith.constant 4 : i32
    %193 = vector.broadcast %c4_i32_90 : i32 to vector<1x256xi32>
    %194 = arith.cmpi sge, %16, %193 : vector<1x256xi32>
    %c0_i32_91 = arith.constant 0 : i32
    %195 = arith.sitofp %c0_i32_91 : i32 to bf16
    %196 = vector.shape_cast %194 : vector<1x256xi1> to vector<1x256xi1>
    %197 = vector.broadcast %196 : vector<1x256xi1> to vector<8x256xi1>
    %198 = vector.broadcast %195 : bf16 to vector<8x256xbf16>
    %199 = arith.select %197, %192, %198 : vector<8x256xi1>, vector<8x256xbf16>
    %c0_92 = arith.constant 0 : index
    %c0_93 = arith.constant 0 : index
    %c200 = arith.constant 200 : index
    %200 = vector.load %arg1[%c0_92, %c0_93, %c200] : memref<1x8x528xbf16, #tpu.memory_space<vmem>>, vector<1x8x256xbf16>
    %201 = vector.shape_cast %200 : vector<1x8x256xbf16> to vector<8x256xbf16>
    %c0_94 = arith.constant 0 : index
    %c0_95 = arith.constant 0 : index
    %c204 = arith.constant 204 : index
    %202 = vector.load %arg1[%c0_94, %c0_95, %c204] : memref<1x8x528xbf16, #tpu.memory_space<vmem>>, vector<1x8x256xbf16>
    %203 = vector.shape_cast %202 : vector<1x8x256xbf16> to vector<8x256xbf16>
    %c12_i32_96 = arith.constant 12 : i32
    %204 = vector.broadcast %c12_i32_96 : i32 to vector<1x256xi32>
    %205 = arith.cmpi slt, %16, %204 : vector<1x256xi32>
    %c0_i32_97 = arith.constant 0 : i32
    %206 = arith.sitofp %c0_i32_97 : i32 to bf16
    %207 = vector.shape_cast %205 : vector<1x256xi1> to vector<1x256xi1>
    %208 = vector.broadcast %207 : vector<1x256xi1> to vector<8x256xi1>
    %209 = vector.broadcast %206 : bf16 to vector<8x256xbf16>
    %210 = arith.select %208, %203, %209 : vector<8x256xi1>, vector<8x256xbf16>
    %211 = tpu.concatenate %159, %161, %170, %179, %181, %190, %199, %201, %210 in 0 : vector<8x256xbf16>, vector<8x256xbf16>, vector<8x256xbf16>, vector<8x256xbf16>, vector<8x256xbf16>, vector<8x256xbf16>, vector<8x256xbf16>, vector<8x256xbf16>, vector<8x256xbf16> -> vector<72x256xbf16>
    %c16 = arith.constant 16 : index
    %c0_98 = arith.constant 0 : index
    %212 = vector.load %arg2[%c16, %c0_98] : memref<32x72xbf16, #tpu.memory_space<vmem>>, vector<8x72xbf16>
    %cst_99 = arith.constant dense<0.000000e+00> : vector<8x256xf32>
    %213 = tpu.matmul %212, %211, %cst_99 {dimension_numbers = #tpu.dot_dimension_numbers<[1], [0], [0], [1], [0, 0, 1, 1], [], []>} : vector<8x72xbf16>, vector<72x256xbf16>, vector<8x256xf32> -> vector<8x256xf32>
    %c16_100 = arith.constant 16 : index
    %c0_101 = arith.constant 0 : index
    %214 = vector.load %arg3[%c16_100, %c0_101] : memref<32x1xf32, #tpu.memory_space<vmem>>, vector<8x1xf32>
    %215 = vector.broadcast %214 : vector<8x1xf32> to vector<8x256xf32>
    %216 = arith.addf %213, %215 : vector<8x256xf32>
    %c0_102 = arith.constant 0 : index
    %c0_103 = arith.constant 0 : index
    %c0_104 = arith.constant 0 : index
    %217 = vector.load %arg1[%c0_102, %c0_103, %c0_104] : memref<1x8x528xbf16, #tpu.memory_space<vmem>>, vector<1x8x256xbf16>
    %218 = vector.shape_cast %217 : vector<1x8x256xbf16> to vector<8x256xbf16>
    %c8_i32 = arith.constant 8 : i32
    %219 = vector.broadcast %c8_i32 : i32 to vector<1x256xi32>
    %220 = arith.cmpi sge, %16, %219 : vector<1x256xi32>
    %c0_i32_105 = arith.constant 0 : i32
    %221 = arith.sitofp %c0_i32_105 : i32 to bf16
    %222 = vector.shape_cast %220 : vector<1x256xi1> to vector<1x256xi1>
    %223 = vector.broadcast %222 : vector<1x256xi1> to vector<8x256xi1>
    %224 = vector.broadcast %221 : bf16 to vector<8x256xbf16>
    %225 = arith.select %223, %218, %224 : vector<8x256xi1>, vector<8x256xbf16>
    %c0_106 = arith.constant 0 : index
    %c0_107 = arith.constant 0 : index
    %c8_108 = arith.constant 8 : index
    %226 = vector.load %arg1[%c0_106, %c0_107, %c8_108] : memref<1x8x528xbf16, #tpu.memory_space<vmem>>, vector<1x8x256xbf16>
    %227 = vector.shape_cast %226 : vector<1x8x256xbf16> to vector<8x256xbf16>
    %c0_109 = arith.constant 0 : index
    %c0_110 = arith.constant 0 : index
    %c16_111 = arith.constant 16 : index
    %228 = vector.load %arg1[%c0_109, %c0_110, %c16_111] : memref<1x8x528xbf16, #tpu.memory_space<vmem>>, vector<1x8x256xbf16>
    %229 = vector.shape_cast %228 : vector<1x8x256xbf16> to vector<8x256xbf16>
    %c8_i32_112 = arith.constant 8 : i32
    %230 = vector.broadcast %c8_i32_112 : i32 to vector<1x256xi32>
    %231 = arith.cmpi slt, %16, %230 : vector<1x256xi32>
    %c0_i32_113 = arith.constant 0 : i32
    %232 = arith.sitofp %c0_i32_113 : i32 to bf16
    %233 = vector.shape_cast %231 : vector<1x256xi1> to vector<1x256xi1>
    %234 = vector.broadcast %233 : vector<1x256xi1> to vector<8x256xi1>
    %235 = vector.broadcast %232 : bf16 to vector<8x256xbf16>
    %236 = arith.select %234, %229, %235 : vector<8x256xi1>, vector<8x256xbf16>
    %c0_114 = arith.constant 0 : index
    %c0_115 = arith.constant 0 : index
    %c128 = arith.constant 128 : index
    %237 = vector.load %arg1[%c0_114, %c0_115, %c128] : memref<1x8x528xbf16, #tpu.memory_space<vmem>>, vector<1x8x256xbf16>
    %238 = vector.shape_cast %237 : vector<1x8x256xbf16> to vector<8x256xbf16>
    %c8_i32_116 = arith.constant 8 : i32
    %239 = vector.broadcast %c8_i32_116 : i32 to vector<1x256xi32>
    %240 = arith.cmpi sge, %16, %239 : vector<1x256xi32>
    %c0_i32_117 = arith.constant 0 : i32
    %241 = arith.sitofp %c0_i32_117 : i32 to bf16
    %242 = vector.shape_cast %240 : vector<1x256xi1> to vector<1x256xi1>
    %243 = vector.broadcast %242 : vector<1x256xi1> to vector<8x256xi1>
    %244 = vector.broadcast %241 : bf16 to vector<8x256xbf16>
    %245 = arith.select %243, %238, %244 : vector<8x256xi1>, vector<8x256xbf16>
    %c0_118 = arith.constant 0 : index
    %c0_119 = arith.constant 0 : index
    %c136_120 = arith.constant 136 : index
    %246 = vector.load %arg1[%c0_118, %c0_119, %c136_120] : memref<1x8x528xbf16, #tpu.memory_space<vmem>>, vector<1x8x256xbf16>
    %247 = vector.shape_cast %246 : vector<1x8x256xbf16> to vector<8x256xbf16>
    %c0_121 = arith.constant 0 : index
    %c0_122 = arith.constant 0 : index
    %c144 = arith.constant 144 : index
    %248 = vector.load %arg1[%c0_121, %c0_122, %c144] : memref<1x8x528xbf16, #tpu.memory_space<vmem>>, vector<1x8x256xbf16>
    %249 = vector.shape_cast %248 : vector<1x8x256xbf16> to vector<8x256xbf16>
    %c8_i32_123 = arith.constant 8 : i32
    %250 = vector.broadcast %c8_i32_123 : i32 to vector<1x256xi32>
    %251 = arith.cmpi slt, %16, %250 : vector<1x256xi32>
    %c0_i32_124 = arith.constant 0 : i32
    %252 = arith.sitofp %c0_i32_124 : i32 to bf16
    %253 = vector.shape_cast %251 : vector<1x256xi1> to vector<1x256xi1>
    %254 = vector.broadcast %253 : vector<1x256xi1> to vector<8x256xi1>
    %255 = vector.broadcast %252 : bf16 to vector<8x256xbf16>
    %256 = arith.select %254, %249, %255 : vector<8x256xi1>, vector<8x256xbf16>
    %c0_125 = arith.constant 0 : index
    %c0_126 = arith.constant 0 : index
    %c256 = arith.constant 256 : index
    %257 = vector.load %arg1[%c0_125, %c0_126, %c256] : memref<1x8x528xbf16, #tpu.memory_space<vmem>>, vector<1x8x256xbf16>
    %258 = vector.shape_cast %257 : vector<1x8x256xbf16> to vector<8x256xbf16>
    %c8_i32_127 = arith.constant 8 : i32
    %259 = vector.broadcast %c8_i32_127 : i32 to vector<1x256xi32>
    %260 = arith.cmpi sge, %16, %259 : vector<1x256xi32>
    %c0_i32_128 = arith.constant 0 : i32
    %261 = arith.sitofp %c0_i32_128 : i32 to bf16
    %262 = vector.shape_cast %260 : vector<1x256xi1> to vector<1x256xi1>
    %263 = vector.broadcast %262 : vector<1x256xi1> to vector<8x256xi1>
    %264 = vector.broadcast %261 : bf16 to vector<8x256xbf16>
    %265 = arith.select %263, %258, %264 : vector<8x256xi1>, vector<8x256xbf16>
    %c0_129 = arith.constant 0 : index
    %c0_130 = arith.constant 0 : index
    %c264 = arith.constant 264 : index
    %266 = vector.load %arg1[%c0_129, %c0_130, %c264] : memref<1x8x528xbf16, #tpu.memory_space<vmem>>, vector<1x8x256xbf16>
    %267 = vector.shape_cast %266 : vector<1x8x256xbf16> to vector<8x256xbf16>
    %c0_131 = arith.constant 0 : index
    %c0_132 = arith.constant 0 : index
    %c272 = arith.constant 272 : index
    %268 = vector.load %arg1[%c0_131, %c0_132, %c272] : memref<1x8x528xbf16, #tpu.memory_space<vmem>>, vector<1x8x256xbf16>
    %269 = vector.shape_cast %268 : vector<1x8x256xbf16> to vector<8x256xbf16>
    %c8_i32_133 = arith.constant 8 : i32
    %270 = vector.broadcast %c8_i32_133 : i32 to vector<1x256xi32>
    %271 = arith.cmpi slt, %16, %270 : vector<1x256xi32>
    %c0_i32_134 = arith.constant 0 : i32
    %272 = arith.sitofp %c0_i32_134 : i32 to bf16
    %273 = vector.shape_cast %271 : vector<1x256xi1> to vector<1x256xi1>
    %274 = vector.broadcast %273 : vector<1x256xi1> to vector<8x256xi1>
    %275 = vector.broadcast %272 : bf16 to vector<8x256xbf16>
    %276 = arith.select %274, %269, %275 : vector<8x256xi1>, vector<8x256xbf16>
    %277 = tpu.concatenate %225, %227, %236, %245, %247, %256, %265, %267, %276 in 0 : vector<8x256xbf16>, vector<8x256xbf16>, vector<8x256xbf16>, vector<8x256xbf16>, vector<8x256xbf16>, vector<8x256xbf16>, vector<8x256xbf16>, vector<8x256xbf16>, vector<8x256xbf16> -> vector<72x256xbf16>
    %c24 = arith.constant 24 : index
    %c0_135 = arith.constant 0 : index
    %278 = vector.load %arg2[%c24, %c0_135] : memref<32x72xbf16, #tpu.memory_space<vmem>>, vector<8x72xbf16>
    %cst_136 = arith.constant dense<0.000000e+00> : vector<8x256xf32>
    %279 = tpu.matmul %278, %277, %cst_136 {dimension_numbers = #tpu.dot_dimension_numbers<[1], [0], [0], [1], [0, 0, 1, 1], [], []>} : vector<8x72xbf16>, vector<72x256xbf16>, vector<8x256xf32> -> vector<8x256xf32>
    %c24_137 = arith.constant 24 : index
    %c0_138 = arith.constant 0 : index
    %280 = vector.load %arg3[%c24_137, %c0_138] : memref<32x1xf32, #tpu.memory_space<vmem>>, vector<8x1xf32>
    %281 = vector.broadcast %280 : vector<8x1xf32> to vector<8x256xf32>
    %282 = arith.addf %279, %281 : vector<8x256xf32>
    %283 = tpu.concatenate %84, %150, %216, %282 in 0 : vector<8x256xf32>, vector<8x256xf32>, vector<8x256xf32>, vector<8x256xf32> -> vector<32x256xf32>
    %c0_139 = arith.constant 0 : index
    %c0_140 = arith.constant 0 : index
    %c0_141 = arith.constant 0 : index
    %284 = vector.load %arg4[%c0_139, %c0_140, %c0_141] : memref<1x32x256xf32, #tpu.memory_space<vmem>>, vector<1x32x256xf32>
    %285 = vector.shape_cast %284 : vector<1x32x256xf32> to vector<32x256xf32>
    %286 = vector.shape_cast %283 : vector<32x256xf32> to vector<1x32x256xf32>
    tpu.vector_store %arg4[%c0_139, %c0_140, %c0_141], %286 {strides = array<i32>} : memref<1x32x256xf32, #tpu.memory_space<vmem>>, vector<1x32x256xf32>,
    return
  }
  func.func @transform_0(%arg0: i32) -> (i32, i32, i32) {
    %c0_i32 = arith.constant 0 : i32
    %c0_i32_0 = arith.constant 0 : i32
    %c0_i32_1 = arith.constant 0 : i32
    return %arg0, %c0_i32, %c0_i32_0 : i32, i32, i32
  }
  func.func @transform_1(%arg0: i32) -> (i32, i32) {
    %c0_i32 = arith.constant 0 : i32
    %c0_i32_0 = arith.constant 0 : i32
    %c0_i32_1 = arith.constant 0 : i32
    return %c0_i32, %c0_i32_0 : i32, i32
  }
  func.func @transform_2(%arg0: i32) -> (i32, i32) {
    %c0_i32 = arith.constant 0 : i32
    %c0_i32_0 = arith.constant 0 : i32
    %c0_i32_1 = arith.constant 0 : i32
    return %c0_i32, %c0_i32_0 : i32, i32
  }
  func.func @transform_3(%arg0: i32) -> (i32, i32, i32) {
    %c0_i32 = arith.constant 0 : i32
    %c0_i32_0 = arith.constant 0 : i32
    %c0_i32_1 = arith.constant 0 : i32
    return %arg0, %c0_i32, %c0_i32_0 : i32, i32, i32
  }
}

</mosaic_0001>

<llo_original>
// kernel: tpu_custom_call.1
$region0: #{tpu_custom_call.1}
  #allocation0 [shape = 'u32[]', space=smem, size = 0x4, offset = 0x4, fixed_abs, tag = 'smem constant byte address 0x4 - core index']
  #allocation1 [shape = 'u32[144,128]{1,0:T(1,128)}', space=vmem, size = 0x12000, scoped, tag = 'internal scratch']
  %s0 = inlined_call_operand.hbm [shape: bf16[2,8,528], index: 0, kind: input, shape index: {}]
  %s1 = inlined_call_operand.vmem [shape: bf16[32,72], index: 1, kind: input, shape index: {}]
  %s2 = inlined_call_operand.vmem [shape: f32[32,1], index: 2, kind: input, shape index: {}]
  %s3 = inlined_call_operand.hbm [shape: f32[2,32,256], index: 3, kind: output, shape index: {}]
  %s4 = sld [smem:[#allocation0]]
  $region49: #{tpu_custom_call.1} parent=0
    _
  %s6 = ssub.s32 1, %s4
  %s7 = scalar_select 0, %s6, %s4
  $region1: #{tpu_custom_call.1} parent=0
    #allocation2 [shape = 'u8[20480]{0}', space=vmem, size = 0x5000, scoped, tag = 'input window, operand 0']
    #allocation3 [shape = 's32[2]{0}', space=sflag, size = 0x8, scoped, tag = 'scoped memory for tpu_custom_call.1']
    #allocation4 [shape = 's32[2]{0}', space=sflag, size = 0x8, scoped, tag = 'scoped memory for tpu_custom_call.1']
    #allocation5 [shape = 'u8[65536]{0}', space=vmem, size = 0x10000, scoped, tag = 'output window, operand 0']
    %8 = vsyncpa [#allocation3], 0
    %s9 = scalar_lea.sflag [#allocation3], 1
    %10 = vsyncpa %s9, 0
    %11 = vsyncpa [#allocation4], 0
    %s12 = scalar_lea.sflag [#allocation4], 1
    %13 = vsyncpa %s12, 0
    loop: start=0, step=1, limit=4
    $region2: #{tpu_custom_call.1} parent=1 // loop_pre_header
      _
    $region3: #{tpu_custom_call.1} parent=1 // loop_header
      %s15 = sphi 0, %s19
      %p16 = scmp.ge.s32.totalorder %s15, 4
      %s25 = sphi 0, %s27
      %s28 = sphi 0, %s25
      %s29 = sphi 0, %s28
      %s45 = sphi 0, %s29
      %s49 = sphi 0, %s49
      %s51 = sphi 0, %s49
      %s52 = sphi 0, %s51
      %s66 = sphi 0, %s52
      %s70 = sphi 0, %s70
      %s72 = sphi 0, %s70
      %s73 = sphi 0, %s72
      %s87 = sphi 0, %s73
      %s93 = sphi 0, %s95
      %s96 = sphi 0, %s93
      %s97 = sphi 0, %s96
      %s113 = sphi 0, %s97
    $region4: #{tpu_custom_call.1} parent=1 // loop_header_branch
      %18 = sbr.rel (%p16) target = $region8
    $region5: #{tpu_custom_call.1} parent=1 // loop_body
      %s20 = ssub.s32 %s15, 1
      %s21 = ssub.s32 %s15, 2
      %s22 = sadd.s32 %s15, 1
      %s23 = ssub.s32 %s15, %s22
      %p24 = scmp.eq.s32.totalorder %s23, 0
      %s26 = sadd.s32 %s25, 1
      %s27 = scalar_select %p24, %s25, %s26
      %p30 = pneg %p24
      %p31 = scmp.eq.s32.totalorder %s15, 1
      %p32 = por %p30, %p31
      %p33 = scmp.ne.s32.totalorder %s25, %s28
      %p34 = scmp.eq.s32.totalorder %s15, 0
      %p35 = por %p33, %p34
      %p36 = scmp.ne.s32.totalorder %s25, %s28
      %p37 = scmp.eq.s32.totalorder %s20, 1
      %p38 = por %p36, %p37
      %p39 = scmp.ne.s32.totalorder %s28, %s29
      %p40 = scmp.eq.s32.totalorder %s20, 0
      %p41 = por %p39, %p40
      %p42 = scmp.ne.s32.totalorder %s28, %s29
      %p43 = scmp.eq.s32.totalorder %s21, 1
      %p44 = por %p42, %p43
      %p46 = scmp.ne.s32.totalorder %s29, %s45
      %p47 = scmp.eq.s32.totalorder %s21, 0
      %p48 = por %p46, %p47
      %s50 = sadd.s32 %s49, 1
      %p53 = scmp.eq.s32.totalorder %s15, 1
      %p54 = scmp.ne.s32.totalorder %s49, %s51
      %p55 = scmp.eq.s32.totalorder %s15, 0
      %p56 = por %p54, %p55
      %p57 = scmp.ne.s32.totalorder %s49, %s51
      %p58 = scmp.eq.s32.totalorder %s20, 1
      %p59 = por %p57, %p58
      %p60 = scmp.ne.s32.totalorder %s51, %s52
      %p61 = scmp.eq.s32.totalorder %s20, 0
      %p62 = por %p60, %p61
      %p63 = scmp.ne.s32.totalorder %s51, %s52
      %p64 = scmp.eq.s32.totalorder %s21, 1
      %p65 = por %p63, %p64
      %p67 = scmp.ne.s32.totalorder %s52, %s66
      %p68 = scmp.eq.s32.totalorder %s21, 0
      %p69 = por %p67, %p68
      %s71 = sadd.s32 %s70, 1
      %p74 = scmp.eq.s32.totalorder %s15, 1
      %p75 = scmp.ne.s32.totalorder %s70, %s72
      %p76 = scmp.eq.s32.totalorder %s15, 0
      %p77 = por %p75, %p76
      %p78 = scmp.ne.s32.totalorder %s70, %s72
      %p79 = scmp.eq.s32.totalorder %s20, 1
      %p80 = por %p78, %p79
      %p81 = scmp.ne.s32.totalorder %s72, %s73
      %p82 = scmp.eq.s32.totalorder %s20, 0
      %p83 = por %p81, %p82
      %p84 = scmp.ne.s32.totalorder %s72, %s73
      %p85 = scmp.eq.s32.totalorder %s21, 1
      %p86 = por %p84, %p85
      %p88 = scmp.ne.s32.totalorder %s73, %s87
      %p89 = scmp.eq.s32.totalorder %s21, 0
      %p90 = por %p88, %p89
      %s91 = ssub.s32 %s15, %s22
      %p92 = scmp.eq.s32.totalorder %s91, 0
      %s94 = sadd.s32 %s93, 1
      %s95 = scalar_select %p92, %s93, %s94
      %p98 = pneg %p92
      %p99 = scmp.eq.s32.totalorder %s15, 1
      %p100 = por %p98, %p99
      %p101 = scmp.ne.s32.totalorder %s93, %s96
      %p102 = scmp.eq.s32.totalorder %s15, 0
      %p103 = por %p101, %p102
      %p104 = scmp.ne.s32.totalorder %s93, %s96
      %p105 = scmp.eq.s32.totalorder %s20, 1
      %p106 = por %p104, %p105
      %p107 = scmp.ne.s32.totalorder %s96, %s97
      %p108 = scmp.eq.s32.totalorder %s20, 0
      %p109 = por %p107, %p108
      %p110 = scmp.ne.s32.totalorder %s96, %s97
      %p111 = scmp.eq.s32.totalorder %s21, 1
      %p112 = por %p110, %p111
      %p114 = scmp.ne.s32.totalorder %s97, %s113
      %p115 = scmp.eq.s32.totalorder %s21, 0
      %p116 = por %p114, %p115
      %p117 = scmp.le.s32.totalorder 1, %s15
      %p118 = scmp.lt.s32.totalorder %s15, 3
      %p119 = pnand %p117, %p118
      %p120 = pneg %p119
      // Predicated region
      $region9: #{tpu_custom_call.1} parent=5 // pred_check
        _
      $region10: #{tpu_custom_call.1} parent=5 // pred_check_branch
        %122 = sbr.rel (%p119) target = $region12
      $region11: #{tpu_custom_call.1} parent=5 // pred_region
        %s123 = ssub.s32 %s15, 1
        // Predicated region
        $region13: #{tpu_custom_call.1} parent=11 // pred_check
          %p124 = pneg %p62
        $region14: #{tpu_custom_call.1} parent=11 // pred_check_branch
          %126 = sbr.rel (%p124) target = $region16
        $region15: #{tpu_custom_call.1} parent=11 // pred_region
          _
        $region16: #{tpu_custom_call.1} parent=11 // pred_fallthru
          _
        // Predicated region
        $region17: #{tpu_custom_call.1} parent=11 // pred_check
          %p127 = pneg %p83
        $region18: #{tpu_custom_call.1} parent=11 // pred_check_branch
          %129 = sbr.rel (%p127) target = $region20
        $region19: #{tpu_custom_call.1} parent=11 // pred_region
          _
        $region20: #{tpu_custom_call.1} parent=11 // pred_fallthru
          _
      $region12: #{tpu_custom_call.1} parent=5 // pred_fallthru
        _
      %p130 = scmp.lt.s32.totalorder %s15, 2
      // Predicated region
      $region21: #{tpu_custom_call.1} parent=5 // pred_check
        %p131 = pneg %p130
      $region22: #{tpu_custom_call.1} parent=5 // pred_check_branch
        %133 = sbr.rel (%p131) target = $region24
      $region23: #{tpu_custom_call.1} parent=5 // pred_region
        // Predicated region
        $region25: #{tpu_custom_call.1} parent=23 // pred_check
          %p134 = pneg %p35
        $region26: #{tpu_custom_call.1} parent=23 // pred_check_branch
          %136 = sbr.rel (%p134) target = $region28
        $region27: #{tpu_custom_call.1} parent=23 // pred_region
          %s137 = sand.u32 %s25, 1
          %s138 = scalar_lea.sflag [#allocation3], %s137
          %s139 = sand.u32 %s25, 1
          %s140 = smul.addr %s139, 20
          %s141 = scalar_lea.vmem [#allocation2], %s140
          %s143 = ssub.s32 320, 320
          %144 = vsyncadd %s138, %s143
          %s145 = smul.addr %s15, 5
          %s146 = smul.addr %s145, 64
          %s147 = scalar_lea.hbm %s0, %s146
          %s149 = sshll.u32 %s141, 4
          %s150 = int_to_ptr.vmem [resolvable:$true] %s149
          %152 = dma.hbm_to_vmem [thread:$0]  %s147, 320, %s150, %s138
        $region28: #{tpu_custom_call.1} parent=23 // pred_fallthru
          _
      $region24: #{tpu_custom_call.1} parent=5 // pred_fallthru
        _
      %p153 = scmp.le.s32.totalorder 1, %s15
      %p154 = scmp.lt.s32.totalorder %s15, 3
      %p155 = pnand %p153, %p154
      %p156 = pneg %p155
      // Predicated region
      $region29: #{tpu_custom_call.1} parent=5 // pred_check
        _
      $region30: #{tpu_custom_call.1} parent=5 // pred_check_branch
        %158 = sbr.rel (%p155) target = $region32
      $region31: #{tpu_custom_call.1} parent=5 // pred_region
        %s159 = ssub.s32 %s15, 1
        %s160 = sand.u32 %s28, 1
        %s161 = scalar_lea.sflag [#allocation3], %s160
        %s162 = sand.u32 %s28, 1
        %s163 = smul.addr %s162, 20
        %s164 = scalar_lea.vmem [#allocation2], %s163
        // Predicated region
        $region33: #{tpu_custom_call.1} parent=31 // pred_check
          %p165 = pneg %p41
        $region34: #{tpu_custom_call.1} parent=31 // pred_check_branch
          %167 = sbr.rel (%p165) target = $region36
        $region35: #{tpu_custom_call.1} parent=31 // pred_region
          %168 = dma.done %s161, 320
        $region36: #{tpu_custom_call.1} parent=31 // pred_fallthru
          _
        %s169 = sand.u32 %s28, 1
        %s170 = scalar_lea.sflag [#allocation3], %s169
        %s171 = sand.u32 %s28, 1
        %s172 = smul.addr %s171, 20
        %s173 = scalar_lea.vmem [#allocation2], %s172
        %p174 = pneg %p41
        %p175 = pneg %p38
        %p176 = pneg %p62
        %p177 = pneg %p59
        %p178 = pneg %p83
        %p179 = pneg %p80
        %p180 = pneg %p109
        %p181 = pneg %p106
        %s182 = sand.u32 %s96, 1
        %s183 = scalar_lea.sflag [#allocation4], %s182
        %s184 = sand.u32 %s96, 1
        %s185 = smul.addr %s184, 64
        %s186 = scalar_lea.vmem [#allocation5], %s185
        %v190 = vlaneseq
        %v191 = vand.u32 %v190, 127
        %v192 = vadd.s32 %v191, 128
        %vm193 = vcmp.lt.s32.totalorder %v191, 0
        %v194 = vsub.s32 0, %v191
        %v195 = vsel %vm193, %v194, %v191
        %v196 = vshrl.u32 %v195, 4
        %v197 = vand.u32 %v195, 15
        %v198 = vsub.s32 0, %v197
        %v199 = vsel %vm193, %v198, %v197
        %vm200 = vcmp.lt.s32.totalorder %v192, 0
        %v201 = vsub.s32 0, %v192
        %v202 = vsel %vm200, %v201, %v192
        %v203 = vshrl.u32 %v202, 4
        %v204 = vand.u32 %v202, 15
        %v205 = vsub.s32 0, %v204
        %v206 = vsel %vm200, %v205, %v204
        %vm207 = vcmp.ne.s32.totalorder %v199, 0
        %vm208 = vcmp.ne.s32.totalorder %v206, 0
        %vm209 = vcmp.lt.s32.totalorder %v199, 0
        %vm210 = vcmp.lt.s32.totalorder %v206, 0
        %vm211 = vmand %vm209, %vm207
        %vm212 = vmand %vm210, %vm208
        %v213 = vadd.s32 %v199, 16
        %v214 = vadd.s32 %v206, 16
        %v215 = vsel %vm211, %v213, %v199
        %v216 = vsel %vm212, %v214, %v206
        %v217 = vld [vmem:[%s164] sm:$0xff]
        %v218 = vld [vmem:[%s164 + $0x8] sm:$0xf]
        %vm219 = vcmp.ge.s32.totalorder %v215, 1
        %vm220 = vcmp.ge.s32.totalorder %v216, 1
        %v221 = vsel %vm219, 1, 0
        %v222 = vsel %vm220, 1, 0
        %vm223 = vcmp.eq.s32.totalorder %v221, 1
        %vm224 = vcmp.eq.s32.totalorder %v222, 1
        %vm225 = vmpackc.low %vm224, %vm223
        %v226 = vsel %vm225, 65537, 0
        %227 = vrot.lane.b32.xlu0 %v226, 119
        %v228 = vpop.permute.xlu0 %227
        %v229 = vrot.slane %v228, 4
        %vm230 = vcmask 973824
        %v231 = vsel %vm230, %v229, %v228
        %vm232 = vcmp.ne.s16.totalorder %v231, 0
        %vm233 = vcmp.ne.s16.totalorder %v229, 0
        %v234 = vsel %vm232, %v217, 0
        %v235 = vsel %vm233, %v218, 0
        %vm236 = vcmp.lt.s32.totalorder %v215, 15
        %vm237 = vcmp.lt.s32.totalorder %v216, 15
        %v238 = vsel %vm236, 1, 0
        %v239 = vsel %vm237, 1, 0
        %vm240 = vcmp.eq.s32.totalorder %v238, 1
        %vm241 = vcmp.eq.s32.totalorder %v239, 1
        %vm242 = vmpackc.low %vm241, %vm240
        %v243 = vsel %vm242, 65537, 0
        %244 = vrot.lane.b32.xlu0 %v243, 121
        %v245 = vpop.permute.xlu0 %244
        %v246 = vrot.slane %v245, 4
        %vm247 = vcmask 990208
        %v248 = vsel %vm247, %v246, %v245
        %vm249 = vcmp.ne.s16.totalorder %v248, 0
        %vm250 = vcmp.ne.s16.totalorder %v246, 0
        %v251 = vsel %vm249, %v217, 0
        %v252 = vsel %vm250, %v218, 0
        %v253 = vld [vmem:[%s164 + $0x4] sm:$0xff]
        %v254 = vld [vmem:[%s164 + $0xc] sm:$0xf]
        %255 = vrot.lane.b32.xlu0 %v226, 7
        %v256 = vpop.permute.xlu0 %255
        %v257 = vrot.slane %v256, 4
        %vm258 = vcmask 56320
        %v259 = vsel %vm258, %v257, %v256
        %vm260 = vcmp.ne.s16.totalorder %v259, 0
        %vm261 = vcmp.ne.s16.totalorder %v257, 0
        %v262 = vsel %vm260, %v253, 0
        %v263 = vsel %vm261, %v254, 0
        %264 = vrot.lane.b32.xlu0 %v243, 9
        %v265 = vpop.permute.xlu0 %264
        %v266 = vrot.slane %v265, 4
        %vm267 = vcmask 72704
        %v268 = vsel %vm267, %v266, %v265
        %vm269 = vcmp.ne.s16.totalorder %v268, 0
        %vm270 = vcmp.ne.s16.totalorder %v266, 0
        %v271 = vsel %vm269, %v253, 0
        %v272 = vsel %vm270, %v254, 0
        %273 = vrot.lane.b32.xlu0 %v226, 23
        %v274 = vpop.permute.xlu0 %273
        %v275 = vrot.slane %v274, 4
        %vm276 = vcmask 187392
        %v277 = vsel %vm276, %v275, %v274
        %vm278 = vcmp.ne.s16.totalorder %v277, 0
        %vm279 = vcmp.ne.s16.totalorder %v275, 0
        %v280 = vsel %vm278, %v253, 0
        %v281 = vsel %vm279, %v254, 0
        %282 = vrot.lane.b32.xlu0 %v243, 25
        %v283 = vpop.permute.xlu0 %282
        %v284 = vrot.slane %v283, 4
        %vm285 = vcmask 203776
        %v286 = vsel %vm285, %v284, %v283
        %vm287 = vcmp.ne.s16.totalorder %v286, 0
        %vm288 = vcmp.ne.s16.totalorder %v284, 0
        %v289 = vsel %vm287, %v253, 0
        %v290 = vsel %vm288, %v254, 0
        %v293 = vunpack.c.l.b16 %v234
        %v294 = vunpack.c.h.b16 %v234
        %v295 = vunpack.c.l.b16 %v235
        %v296 = vpack.c.b16 %v293, %v293
        %v297 = vpack.c.b16 %v294, %v294
        %v298 = vpack.c.b16 %v295, %v295
        %v301 = vunpack.c.l.b16 %v217
        %v302 = vunpack.c.h.b16 %v217
        %v303 = vunpack.c.l.b16 %v218
        %v304 = vpack.c.b16 %v301, %v301
        %v305 = vpack.c.b16 %v302, %v302
        %v306 = vpack.c.b16 %v303, %v303
        %307 = vrot.lane.b32.xlu0 %v304, 127
        %v308 = vpop.permute.xlu0 %307
        %309 = vrot.lane.b32.xlu0 %v305, 127
        %v310 = vpop.permute.xlu0 %309
        %311 = vrot.lane.b32.xlu0 %v306, 127
        %v312 = vpop.permute.xlu0 %311
        %vm313 = vcmask 1039360
        %v314 = vsel %vm313, %v308, %v310
        %v315 = vsel %vm313, %v310, %v312
        %v318 = vunpack.c.l.b16 %v251
        %v319 = vunpack.c.h.b16 %v251
        %v320 = vunpack.c.l.b16 %v252
        %v321 = vpack.c.b16 %v318, %v318
        %v322 = vpack.c.b16 %v319, %v319
        %v323 = vpack.c.b16 %v320, %v320
        %324 = vrot.lane.b32.xlu0 %v321, 126
        %v325 = vpop.permute.xlu0 %324
        %326 = vrot.lane.b32.xlu0 %v322, 126
        %v327 = vpop.permute.xlu0 %326
        %328 = vrot.lane.b32.xlu0 %v323, 126
        %v329 = vpop.permute.xlu0 %328
        %vm330 = vcmask 1031168
        %v331 = vsel %vm330, %v325, %v327
        %v332 = vsel %vm330, %v327, %v329
        %v335 = vunpack.c.l.b16 %v262
        %v336 = vunpack.c.h.b16 %v262
        %v337 = vunpack.c.l.b16 %v263
        %v338 = vpack.c.b16 %v335, %v335
        %v339 = vpack.c.b16 %v336, %v336
        %v340 = vpack.c.b16 %v337, %v337
        %341 = vrot.lane.b32.xlu0 %v338, 112
        %v342 = vpop.permute.xlu0 %341
        %343 = vrot.lane.b32.xlu0 %v339, 112
        %v344 = vpop.permute.xlu0 %343
        %345 = vrot.lane.b32.xlu0 %v340, 112
        %v346 = vpop.permute.xlu0 %345
        %vm347 = vcmask 916480
        %v348 = vsel %vm347, %v342, %v344
        %v349 = vsel %vm347, %v344, %v346
        %v352 = vunpack.c.l.b16 %v253
        %v353 = vunpack.c.h.b16 %v253
        %v354 = vunpack.c.l.b16 %v254
        %v355 = vpack.c.b16 %v352, %v352
        %v356 = vpack.c.b16 %v353, %v353
        %v357 = vpack.c.b16 %v354, %v354
        %358 = vrot.lane.b32.xlu0 %v355, 111
        %v359 = vpop.permute.xlu0 %358
        %360 = vrot.lane.b32.xlu0 %v356, 111
        %v361 = vpop.permute.xlu0 %360
        %362 = vrot.lane.b32.xlu0 %v357, 111
        %v363 = vpop.permute.xlu0 %362
        %vm364 = vcmask 908288
        %v365 = vsel %vm364, %v359, %v361
        %v366 = vsel %vm364, %v361, %v363
        %v369 = vunpack.c.l.b16 %v271
        %v370 = vunpack.c.h.b16 %v271
        %v371 = vunpack.c.l.b16 %v272
        %v372 = vpack.c.b16 %v369, %v369
        %v373 = vpack.c.b16 %v370, %v370
        %v374 = vpack.c.b16 %v371, %v371
        %375 = vrot.lane.b32.xlu0 %v372, 110
        %v376 = vpop.permute.xlu0 %375
        %377 = vrot.lane.b32.xlu0 %v373, 110
        %v378 = vpop.permute.xlu0 %377
        %379 = vrot.lane.b32.xlu0 %v374, 110
        %v380 = vpop.permute.xlu0 %379
        %vm381 = vcmask 900096
        %v382 = vsel %vm381, %v376, %v378
        %v383 = vsel %vm381, %v378, %v380
        %v386 = vunpack.c.l.b16 %v280
        %v387 = vunpack.c.h.b16 %v280
        %v388 = vunpack.c.l.b16 %v281
        %v389 = vpack.c.b16 %v386, %v386
        %v390 = vpack.c.b16 %v387, %v387
        %v391 = vpack.c.b16 %v388, %v388
        %392 = vrot.lane.b32.xlu0 %v389, 96
        %v393 = vpop.permute.xlu0 %392
        %394 = vrot.lane.b32.xlu0 %v390, 96
        %v395 = vpop.permute.xlu0 %394
        %396 = vrot.lane.b32.xlu0 %v391, 96
        %v397 = vpop.permute.xlu0 %396
        %vm398 = vcmask 785408
        %v399 = vsel %vm398, %v393, %v395
        %v400 = vsel %vm398, %v395, %v397
        %401 = vrot.lane.b32.xlu0 %v355, 95
        %v402 = vpop.permute.xlu0 %401
        %403 = vrot.lane.b32.xlu0 %v356, 95
        %v404 = vpop.permute.xlu0 %403
        %405 = vrot.lane.b32.xlu0 %v357, 95
        %v406 = vpop.permute.xlu0 %405
        %vm407 = vcmask 777216
        %v408 = vsel %vm407, %v402, %v404
        %v409 = vsel %vm407, %v404, %v406
        %v412 = vunpack.c.l.b16 %v289
        %v413 = vunpack.c.h.b16 %v289
        %v414 = vunpack.c.l.b16 %v290
        %v415 = vpack.c.b16 %v412, %v412
        %v416 = vpack.c.b16 %v413, %v413
        %v417 = vpack.c.b16 %v414, %v414
        %418 = vrot.lane.b32.xlu0 %v415, 94
        %v419 = vpop.permute.xlu0 %418
        %420 = vrot.lane.b32.xlu0 %v416, 94
        %v421 = vpop.permute.xlu0 %420
        %422 = vrot.lane.b32.xlu0 %v417, 94
        %v423 = vpop.permute.xlu0 %422
        %vm424 = vcmask 769024
        %v425 = vsel %vm424, %v419, %v421
        %v426 = vsel %vm424, %v421, %v423
        %vm427 = vcmask 1043456
        %v430 = vsel %vm427, %v296, %v314
        %v433 = vsel %vm427, %v297, %v315
        %v436 = vsel %vm427, %v298, %v312
        %v439 = vsel %vm427, %v331, %v342
        %v442 = vsel %vm427, %v332, %v348
        %v445 = vsel %vm427, %v329, %v349
        %v448 = vsel %vm427, %v359, %v376
        %v451 = vsel %vm427, %v365, %v382
        %v454 = vsel %vm427, %v366, %v383
        %v457 = vsel %vm427, %v393, %v402
        %v460 = vsel %vm427, %v399, %v408
        %v463 = vsel %vm427, %v400, %v409
        %v464 = vld [vmem:[%s1] sm:$0xf]
        %v465 = vld [vmem:[%s2] sm:$0xff]
        %467 = vset.pattern.permute.xlu0 0
        %468 = vperm.xlu0 %467, %v465
        %v469 = vpop.permute.xlu0 %468
        %483 = vrot.lane.b32.xlu0 %v430, 9
        %v484 = vpop.permute.xlu0 %483
        %485 = vrot.lane.b32.xlu0 %v433, 9
        %v486 = vpop.permute.xlu0 %485
        %487 = vrot.lane.b32.xlu0 %v436, 9
        %v488 = vpop.permute.xlu0 %487
        %489 = vrot.lane.b32.xlu0 %v439, 9
        %v490 = vpop.permute.xlu0 %489
        %491 = vrot.lane.b32.xlu0 %v442, 9
        %v492 = vpop.permute.xlu0 %491
        %493 = vrot.lane.b32.xlu0 %v445, 9
        %v494 = vpop.permute.xlu0 %493
        %495 = vrot.lane.b32.xlu0 %v448, 9
        %v496 = vpop.permute.xlu0 %495
        %497 = vrot.lane.b32.xlu0 %v451, 9
        %v498 = vpop.permute.xlu0 %497
        %499 = vrot.lane.b32.xlu0 %v454, 9
        %v500 = vpop.permute.xlu0 %499
        %501 = vrot.lane.b32.xlu0 %v457, 9
        %v502 = vpop.permute.xlu0 %501
        %503 = vrot.lane.b32.xlu0 %v460, 9
        %v504 = vpop.permute.xlu0 %503
        %505 = vrot.lane.b32.xlu0 %v463, 9
        %v506 = vpop.permute.xlu0 %505
        %507 = vrot.lane.b32.xlu0 %v419, 9
        %v508 = vpop.permute.xlu0 %507
        %509 = vrot.lane.b32.xlu0 %v425, 9
        %v510 = vpop.permute.xlu0 %509
        %511 = vrot.lane.b32.xlu0 %v426, 9
        %v512 = vpop.permute.xlu0 %511
        %v513 = vsel %vm267, %v484, %v486
        %v514 = vsel %vm267, %v486, %v488
        %v515 = vsel %vm267, %v490, %v492
        %v516 = vsel %vm267, %v492, %v494
        %v517 = vsel %vm267, %v496, %v498
        %v518 = vsel %vm267, %v498, %v500
        %v519 = vsel %vm267, %v502, %v504
        %v520 = vsel %vm267, %v504, %v506
        %v521 = vsel %vm267, %v508, %v510
        %v522 = vsel %vm267, %v510, %v512
        %vm531 = vcmask 588800
        %v533 = vsel %vm531, %v464, 0
        %v536 = vsel %vm427, %v521, 0
        %v539 = vsel %vm427, %v522, 0
        %541 = vmatprep.subr.bf16.mxu0 %v514
        %542 = vmatpush1.bf16.msra.mxu0 %v513
        %543 = vmatprep.subr.bf16.mxu0 %v516
        %544 = vmatpush1.bf16.msra.mxu0 %v515
        %545 = vmatprep.subr.bf16.mxu0 %v518
        %546 = vmatpush1.bf16.msra.mxu0 %v517
        %547 = vmatprep.subr.bf16.mxu0 %v520
        %548 = vmatpush1.bf16.msra.mxu0 %v519
        %549 = vmatprep.subr.bf16.mxu0 %v539
        %550 = vmatpush1.bf16.msra.mxu0 %v536
        %551 = vmatprep.subr.bf16.mxu0 0
        %552 = vmatpush1.bf16.msra.mxu0 0
        %553 = vmatprep.subr.bf16.mxu0 0
        %554 = vmatpush1.bf16.msra.mxu0 0
        %555 = vmatprep.subr.bf16.mxu0 0
        %556 = vmatpush1.bf16.msra.mxu0 0
        %557 = vmatprep.subr.bf16.mxu0 0
        %558 = vmatpush1.bf16.msra.mxu0 0
        %559 = vmatprep.subr.bf16.mxu0 0
        %560 = vmatpush1.bf16.msra.mxu0 0
        %561 = vmatprep.subr.bf16.mxu0 0
        %562 = vmatpush1.bf16.msra.mxu0 0
        %563 = vmatprep.subr.bf16.mxu0 0
        %564 = vmatpush1.bf16.msra.mxu0 0
        %565 = vmatprep.subr.bf16.mxu0 0
        %566 = vmatpush1.bf16.msra.mxu0 0
        %567 = vmatprep.subr.bf16.mxu0 0
        %568 = vmatpush1.bf16.msra.mxu0 0
        %569 = vmatprep.subr.bf16.mxu0 0
        %570 = vmatpush1.bf16.msra.mxu0 0
        %571 = vmatprep.subr.bf16.mxu0 0
        %572 = vmatpush1.bf16.msra.mxu0 0
        %573 = vmatprep.mubr.bf16.mxu0 0
        %574 = vmatmul.mubr.bf16.gmra.mrb[0].mxu0 %v533
        %v575 = vpop.f32.mrb[0].mxu0
        %v576 = vadd.f32 %v469, %v575
        %v577 = vpop.f32.mrb[0].mxu0
        %v578 = vadd.f32 %v469, %v577
        %v579 = vpop.f32.mrb[0].mxu0
        %v580 = vpop.f32.mrb[0].mxu0
        %581 = vdwg.mxu0
        %v582 = vmax.f32 %v576, 0.0
        %v583 = vmax.f32 %v578, 0.0
        %vm584 = vcmp.ge.s32.totalorder %v215, 2
        %vm585 = vcmp.ge.s32.totalorder %v216, 2
        %v586 = vsel %vm584, 1, 0
        %v587 = vsel %vm585, 1, 0
        %vm588 = vcmp.eq.s32.totalorder %v586, 1
        %vm589 = vcmp.eq.s32.totalorder %v587, 1
        %vm590 = vmpackc.low %vm589, %vm588
        %v591 = vsel %vm590, 65537, 0
        %592 = vrot.lane.b32.xlu0 %v591, 102
        %v593 = vpop.permute.xlu0 %592
        %v594 = vrot.slane %v593, 4
        %vm595 = vcmask 834560
        %v596 = vsel %vm595, %v594, %v593
        %vm597 = vcmp.ne.s16.totalorder %v596, 0
        %vm598 = vcmp.ne.s16.totalorder %v594, 0
        %v599 = vsel %vm597, %v217, 0
        %v600 = vsel %vm598, %v218, 0
        %vm601 = vcmp.lt.s32.totalorder %v215, 14
        %vm602 = vcmp.lt.s32.totalorder %v216, 14
        %v603 = vsel %vm601, 1, 0
        %v604 = vsel %vm602, 1, 0
        %vm605 = vcmp.eq.s32.totalorder %v603, 1
        %vm606 = vcmp.eq.s32.totalorder %v604, 1
        %vm607 = vmpackc.low %vm606, %vm605
        %v608 = vsel %vm607, 65537, 0
        %609 = vrot.lane.b32.xlu0 %v608, 106
        %v610 = vpop.permute.xlu0 %609
        %v611 = vrot.slane %v610, 4
        %vm612 = vcmask 867328
        %v613 = vsel %vm612, %v611, %v610
        %vm614 = vcmp.ne.s16.totalorder %v613, 0
        %vm615 = vcmp.ne.s16.totalorder %v611, 0
        %v616 = vsel %vm614, %v217, 0
        %v617 = vsel %vm615, %v218, 0
        %618 = vrot.lane.b32.xlu0 %v591, 6
        %v619 = vpop.permute.xlu0 %618
        %v620 = vrot.slane %v619, 4
        %vm621 = vcmask 48128
        %v622 = vsel %vm621, %v620, %v619
        %vm623 = vcmp.ne.s16.totalorder %v622, 0
        %vm624 = vcmp.ne.s16.totalorder %v620, 0
        %v625 = vsel %vm623, %v253, 0
        %v626 = vsel %vm624, %v254, 0
        %627 = vrot.lane.b32.xlu0 %v608, 10
        %v628 = vpop.permute.xlu0 %627
        %v629 = vrot.slane %v628, 4
        %vm630 = vcmask 80896
        %v631 = vsel %vm630, %v629, %v628
        %vm632 = vcmp.ne.s16.totalorder %v631, 0
        %vm633 = vcmp.ne.s16.totalorder %v629, 0
        %v634 = vsel %vm632, %v253, 0
        %v635 = vsel %vm633, %v254, 0
        %636 = vrot.lane.b32.xlu0 %v591, 38
        %v637 = vpop.permute.xlu0 %636
        %v638 = vrot.slane %v637, 4
        %vm639 = vcmask 310272
        %v640 = vsel %vm639, %v638, %v637
        %vm641 = vcmp.ne.s16.totalorder %v640, 0
        %vm642 = vcmp.ne.s16.totalorder %v638, 0
        %v643 = vsel %vm641, %v253, 0
        %v644 = vsel %vm642, %v254, 0
        %645 = vrot.lane.b32.xlu0 %v608, 42
        %v646 = vpop.permute.xlu0 %645
        %v647 = vrot.slane %v646, 4
        %vm648 = vcmask 343040
        %v649 = vsel %vm648, %v647, %v646
        %vm650 = vcmp.ne.s16.totalorder %v649, 0
        %vm651 = vcmp.ne.s16.totalorder %v647, 0
        %v652 = vsel %vm650, %v253, 0
        %v653 = vsel %vm651, %v254, 0
        %v656 = vunpack.c.l.b16 %v599
        %v657 = vunpack.c.h.b16 %v599
        %v658 = vunpack.c.l.b16 %v600
        %v659 = vpack.c.b16 %v656, %v656
        %v660 = vpack.c.b16 %v657, %v657
        %v661 = vpack.c.b16 %v658, %v658
        %662 = vrot.lane.b32.xlu0 %v304, 126
        %v663 = vpop.permute.xlu0 %662
        %664 = vrot.lane.b32.xlu0 %v305, 126
        %v665 = vpop.permute.xlu0 %664
        %666 = vrot.lane.b32.xlu0 %v306, 126
        %v667 = vpop.permute.xlu0 %666
        %v668 = vsel %vm330, %v663, %v665
        %v669 = vsel %vm330, %v665, %v667
        %v672 = vunpack.c.l.b16 %v616
        %v673 = vunpack.c.h.b16 %v616
        %v674 = vunpack.c.l.b16 %v617
        %v675 = vpack.c.b16 %v672, %v672
        %v676 = vpack.c.b16 %v673, %v673
        %v677 = vpack.c.b16 %v674, %v674
        %678 = vrot.lane.b32.xlu0 %v675, 124
        %v679 = vpop.permute.xlu0 %678
        %680 = vrot.lane.b32.xlu0 %v676, 124
        %v681 = vpop.permute.xlu0 %680
        %682 = vrot.lane.b32.xlu0 %v677, 124
        %v683 = vpop.permute.xlu0 %682
        %vm684 = vcmask 1014784
        %v685 = vsel %vm684, %v679, %v681
        %v686 = vsel %vm684, %v681, %v683
        %v689 = vunpack.c.l.b16 %v625
        %v690 = vunpack.c.h.b16 %v625
        %v691 = vunpack.c.l.b16 %v626
        %v692 = vpack.c.b16 %v689, %v689
        %v693 = vpack.c.b16 %v690, %v690
        %v694 = vpack.c.b16 %v691, %v691
        %695 = vrot.lane.b32.xlu0 %v692, 96
        %v696 = vpop.permute.xlu0 %695
        %697 = vrot.lane.b32.xlu0 %v693, 96
        %v698 = vpop.permute.xlu0 %697
        %699 = vrot.lane.b32.xlu0 %v694, 96
        %v700 = vpop.permute.xlu0 %699
        %v701 = vsel %vm398, %v696, %v698
        %v702 = vsel %vm398, %v698, %v700
        %703 = vrot.lane.b32.xlu0 %v355, 94
        %v704 = vpop.permute.xlu0 %703
        %705 = vrot.lane.b32.xlu0 %v356, 94
        %v706 = vpop.permute.xlu0 %705
        %707 = vrot.lane.b32.xlu0 %v357, 94
        %v708 = vpop.permute.xlu0 %707
        %v709 = vsel %vm424, %v704, %v706
        %v710 = vsel %vm424, %v706, %v708
        %v713 = vunpack.c.l.b16 %v634
        %v714 = vunpack.c.h.b16 %v634
        %v715 = vunpack.c.l.b16 %v635
        %v716 = vpack.c.b16 %v713, %v713
        %v717 = vpack.c.b16 %v714, %v714
        %v718 = vpack.c.b16 %v715, %v715
        %719 = vrot.lane.b32.xlu0 %v716, 92
        %v720 = vpop.permute.xlu0 %719
        %721 = vrot.lane.b32.xlu0 %v717, 92
        %v722 = vpop.permute.xlu0 %721
        %723 = vrot.lane.b32.xlu0 %v718, 92
        %v724 = vpop.permute.xlu0 %723
        %vm725 = vcmask 752640
        %v726 = vsel %vm725, %v720, %v722
        %v727 = vsel %vm725, %v722, %v724
        %v730 = vunpack.c.l.b16 %v643
        %v731 = vunpack.c.h.b16 %v643
        %v732 = vunpack.c.l.b16 %v644
        %v733 = vpack.c.b16 %v730, %v730
        %v734 = vpack.c.b16 %v731, %v731
        %v735 = vpack.c.b16 %v732, %v732
        %736 = vrot.lane.b32.xlu0 %v733, 64
        %v737 = vpop.permute.xlu0 %736
        %738 = vrot.lane.b32.xlu0 %v734, 64
        %v739 = vpop.permute.xlu0 %738
        %740 = vrot.lane.b32.xlu0 %v735, 64
        %v741 = vpop.permute.xlu0 %740
        %vm742 = vcmask 523264
        %v743 = vsel %vm742, %v737, %v739
        %v744 = vsel %vm742, %v739, %v741
        %745 = vrot.lane.b32.xlu0 %v355, 62
        %v746 = vpop.permute.xlu0 %745
        %747 = vrot.lane.b32.xlu0 %v356, 62
        %v748 = vpop.permute.xlu0 %747
        %749 = vrot.lane.b32.xlu0 %v357, 62
        %v750 = vpop.permute.xlu0 %749
        %vm751 = vcmask 506880
        %v752 = vsel %vm751, %v746, %v748
        %v753 = vsel %vm751, %v748, %v750
        %v756 = vunpack.c.l.b16 %v652
        %v757 = vunpack.c.h.b16 %v652
        %v758 = vunpack.c.l.b16 %v653
        %v759 = vpack.c.b16 %v756, %v756
        %v760 = vpack.c.b16 %v757, %v757
        %v761 = vpack.c.b16 %v758, %v758
        %762 = vrot.lane.b32.xlu0 %v759, 60
        %v763 = vpop.permute.xlu0 %762
        %764 = vrot.lane.b32.xlu0 %v760, 60
        %v765 = vpop.permute.xlu0 %764
        %766 = vrot.lane.b32.xlu0 %v761, 60
        %v767 = vpop.permute.xlu0 %766
        %vm768 = vcmask 490496
        %v769 = vsel %vm768, %v763, %v765
        %v770 = vsel %vm768, %v765, %v767
        %v773 = vsel %vm427, %v659, %v668
        %v776 = vsel %vm427, %v660, %v669
        %v779 = vsel %vm427, %v661, %v667
        %v782 = vsel %vm427, %v685, %v696
        %v785 = vsel %vm427, %v686, %v701
        %v788 = vsel %vm427, %v683, %v702
        %v791 = vsel %vm427, %v704, %v720
        %v794 = vsel %vm427, %v709, %v726
        %v797 = vsel %vm427, %v710, %v727
        %v800 = vsel %vm427, %v737, %v746
        %v803 = vsel %vm427, %v743, %v752
        %v806 = vsel %vm427, %v744, %v753
        %v807 = vld [vmem:[%s1 + $0x4] sm:$0xf]
        %v808 = vld [vmem:[%s2 + $0x8] sm:$0xff]
        %810 = vset.pattern.permute.xlu0 0
        %811 = vperm.xlu0 %810, %v808
        %v812 = vpop.permute.xlu0 %811
        %826 = vrot.lane.b32.xlu0 %v773, 26
        %v827 = vpop.permute.xlu0 %826
        %828 = vrot.lane.b32.xlu0 %v776, 26
        %v829 = vpop.permute.xlu0 %828
        %830 = vrot.lane.b32.xlu0 %v779, 26
        %v831 = vpop.permute.xlu0 %830
        %832 = vrot.lane.b32.xlu0 %v782, 26
        %v833 = vpop.permute.xlu0 %832
        %834 = vrot.lane.b32.xlu0 %v785, 26
        %v835 = vpop.permute.xlu0 %834
        %836 = vrot.lane.b32.xlu0 %v788, 26
        %v837 = vpop.permute.xlu0 %836
        %838 = vrot.lane.b32.xlu0 %v791, 26
        %v839 = vpop.permute.xlu0 %838
        %840 = vrot.lane.b32.xlu0 %v794, 26
        %v841 = vpop.permute.xlu0 %840
        %842 = vrot.lane.b32.xlu0 %v797, 26
        %v843 = vpop.permute.xlu0 %842
        %844 = vrot.lane.b32.xlu0 %v800, 26
        %v845 = vpop.permute.xlu0 %844
        %846 = vrot.lane.b32.xlu0 %v803, 26
        %v847 = vpop.permute.xlu0 %846
        %848 = vrot.lane.b32.xlu0 %v806, 26
        %v849 = vpop.permute.xlu0 %848
        %850 = vrot.lane.b32.xlu0 %v763, 26
        %v851 = vpop.permute.xlu0 %850
        %852 = vrot.lane.b32.xlu0 %v769, 26
        %v853 = vpop.permute.xlu0 %852
        %854 = vrot.lane.b32.xlu0 %v770, 26
        %v855 = vpop.permute.xlu0 %854
        %vm856 = vcmask 211968
        %v857 = vsel %vm856, %v827, %v829
        %v858 = vsel %vm856, %v829, %v831
        %v859 = vsel %vm856, %v833, %v835
        %v860 = vsel %vm856, %v835, %v837
        %v861 = vsel %vm856, %v839, %v841
        %v862 = vsel %vm856, %v841, %v843
        %v863 = vsel %vm856, %v845, %v847
        %v864 = vsel %vm856, %v847, %v849
        %v865 = vsel %vm856, %v851, %v853
        %v866 = vsel %vm856, %v853, %v855
        %v876 = vsel %vm531, %v807, 0
        %v879 = vsel %vm427, %v865, 0
        %v882 = vsel %vm427, %v866, 0
        %884 = vmatprep.subr.bf16.mxu0 %v858
        %885 = vmatpush1.bf16.msra.mxu0 %v857
        %886 = vmatprep.subr.bf16.mxu0 %v860
        %887 = vmatpush1.bf16.msra.mxu0 %v859
        %888 = vmatprep.subr.bf16.mxu0 %v862
        %889 = vmatpush1.bf16.msra.mxu0 %v861
        %890 = vmatprep.subr.bf16.mxu0 %v864
        %891 = vmatpush1.bf16.msra.mxu0 %v863
        %892 = vmatprep.subr.bf16.mxu0 %v882
        %893 = vmatpush1.bf16.msra.mxu0 %v879
        %894 = vmatprep.subr.bf16.mxu0 0
        %895 = vmatpush1.bf16.msra.mxu0 0
        %896 = vmatprep.subr.bf16.mxu0 0
        %897 = vmatpush1.bf16.msra.mxu0 0
        %898 = vmatprep.subr.bf16.mxu0 0
        %899 = vmatpush1.bf16.msra.mxu0 0
        %900 = vmatprep.subr.bf16.mxu0 0
        %901 = vmatpush1.bf16.msra.mxu0 0
        %902 = vmatprep.subr.bf16.mxu0 0
        %903 = vmatpush1.bf16.msra.mxu0 0
        %904 = vmatprep.subr.bf16.mxu0 0
        %905 = vmatpush1.bf16.msra.mxu0 0
        %906 = vmatprep.subr.bf16.mxu0 0
        %907 = vmatpush1.bf16.msra.mxu0 0
        %908 = vmatprep.subr.bf16.mxu0 0
        %909 = vmatpush1.bf16.msra.mxu0 0
        %910 = vmatprep.subr.bf16.mxu0 0
        %911 = vmatpush1.bf16.msra.mxu0 0
        %912 = vmatprep.subr.bf16.mxu0 0
        %913 = vmatpush1.bf16.msra.mxu0 0
        %914 = vmatprep.subr.bf16.mxu0 0
        %915 = vmatpush1.bf16.msra.mxu0 0
        %916 = vmatprep.mubr.bf16.mxu0 0
        %917 = vmatmul.mubr.bf16.gmra.mrb[0].mxu0 %v876
        %v918 = vpop.f32.mrb[0].mxu0
        %v919 = vadd.f32 %v812, %v918
        %v920 = vpop.f32.mrb[0].mxu0
        %v921 = vadd.f32 %v812, %v920
        %v922 = vpop.f32.mrb[0].mxu0
        %v923 = vpop.f32.mrb[0].mxu0
        %924 = vdwg.mxu0
        %vm925 = vcmp.ge.s32.totalorder %v215, 4
        %vm926 = vcmp.ge.s32.totalorder %v216, 4
        %v927 = vsel %vm925, 1, 0
        %v928 = vsel %vm926, 1, 0
        %vm929 = vcmp.eq.s32.totalorder %v927, 1
        %vm930 = vcmp.eq.s32.totalorder %v928, 1
        %vm931 = vmpackc.low %vm930, %vm929
        %v932 = vsel %vm931, 65537, 0
        %933 = vrot.lane.b32.xlu0 %v932, 68
        %v934 = vpop.permute.xlu0 %933
        %v935 = vrot.slane %v934, 4
        %vm936 = vcmask 556032
        %v937 = vsel %vm936, %v935, %v934
        %vm938 = vcmp.ne.s16.totalorder %v937, 0
        %vm939 = vcmp.ne.s16.totalorder %v935, 0
        %v940 = vsel %vm938, %v217, 0
        %v941 = vsel %vm939, %v218, 0
        %vm942 = vcmp.lt.s32.totalorder %v215, 12
        %vm943 = vcmp.lt.s32.totalorder %v216, 12
        %v944 = vsel %vm942, 1, 0
        %v945 = vsel %vm943, 1, 0
        %vm946 = vcmp.eq.s32.totalorder %v944, 1
        %vm947 = vcmp.eq.s32.totalorder %v945, 1
        %vm948 = vmpackc.low %vm947, %vm946
        %v949 = vsel %vm948, 65537, 0
        %950 = vrot.lane.b32.xlu0 %v949, 76
        %v951 = vpop.permute.xlu0 %950
        %v952 = vrot.slane %v951, 4
        %vm953 = vcmask 621568
        %v954 = vsel %vm953, %v952, %v951
        %vm955 = vcmp.ne.s16.totalorder %v954, 0
        %vm956 = vcmp.ne.s16.totalorder %v952, 0
        %v957 = vsel %vm955, %v217, 0
        %v958 = vsel %vm956, %v218, 0
        %959 = vrot.lane.b32.xlu0 %v932, 4
        %v960 = vpop.permute.xlu0 %959
        %v961 = vrot.slane %v960, 4
        %vm962 = vcmask 31744
        %v963 = vsel %vm962, %v961, %v960
        %vm964 = vcmp.ne.s16.totalorder %v963, 0
        %vm965 = vcmp.ne.s16.totalorder %v961, 0
        %v966 = vsel %vm964, %v253, 0
        %v967 = vsel %vm965, %v254, 0
        %968 = vrot.lane.b32.xlu0 %v949, 12
        %v969 = vpop.permute.xlu0 %968
        %v970 = vrot.slane %v969, 4
        %vm971 = vcmask 97280
        %v972 = vsel %vm971, %v970, %v969
        %vm973 = vcmp.ne.s16.totalorder %v972, 0
        %vm974 = vcmp.ne.s16.totalorder %v970, 0
        %v975 = vsel %vm973, %v253, 0
        %v976 = vsel %vm974, %v254, 0
        %v977 = vsel %vm938, %v253, 0
        %v978 = vsel %vm939, %v254, 0
        %v979 = vsel %vm955, %v253, 0
        %v980 = vsel %vm956, %v254, 0
        %v983 = vunpack.c.l.b16 %v940
        %v984 = vunpack.c.h.b16 %v940
        %v985 = vunpack.c.l.b16 %v941
        %v986 = vpack.c.b16 %v983, %v983
        %v987 = vpack.c.b16 %v984, %v984
        %v988 = vpack.c.b16 %v985, %v985
        %989 = vrot.lane.b32.xlu0 %v304, 124
        %v990 = vpop.permute.xlu0 %989
        %991 = vrot.lane.b32.xlu0 %v305, 124
        %v992 = vpop.permute.xlu0 %991
        %993 = vrot.lane.b32.xlu0 %v306, 124
        %v994 = vpop.permute.xlu0 %993
        %v995 = vsel %vm684, %v990, %v992
        %v996 = vsel %vm684, %v992, %v994
        %v999 = vunpack.c.l.b16 %v957
        %v1000 = vunpack.c.h.b16 %v957
        %v1001 = vunpack.c.l.b16 %v958
        %v1002 = vpack.c.b16 %v999, %v999
        %v1003 = vpack.c.b16 %v1000, %v1000
        %v1004 = vpack.c.b16 %v1001, %v1001
        %1005 = vrot.lane.b32.xlu0 %v1002, 120
        %v1006 = vpop.permute.xlu0 %1005
        %1007 = vrot.lane.b32.xlu0 %v1003, 120
        %v1008 = vpop.permute.xlu0 %1007
        %1009 = vrot.lane.b32.xlu0 %v1004, 120
        %v1010 = vpop.permute.xlu0 %1009
        %vm1011 = vcmask 982016
        %v1012 = vsel %vm1011, %v1006, %v1008
        %v1013 = vsel %vm1011, %v1008, %v1010
        %v1016 = vunpack.c.l.b16 %v966
        %v1017 = vunpack.c.h.b16 %v966
        %v1018 = vunpack.c.l.b16 %v967
        %v1019 = vpack.c.b16 %v1016, %v1016
        %v1020 = vpack.c.b16 %v1017, %v1017
        %v1021 = vpack.c.b16 %v1018, %v1018
        %1022 = vrot.lane.b32.xlu0 %v1019, 64
        %v1023 = vpop.permute.xlu0 %1022
        %1024 = vrot.lane.b32.xlu0 %v1020, 64
        %v1025 = vpop.permute.xlu0 %1024
        %1026 = vrot.lane.b32.xlu0 %v1021, 64
        %v1027 = vpop.permute.xlu0 %1026
        %v1028 = vsel %vm742, %v1023, %v1025
        %v1029 = vsel %vm742, %v1025, %v1027
        %1030 = vrot.lane.b32.xlu0 %v355, 60
        %v1031 = vpop.permute.xlu0 %1030
        %1032 = vrot.lane.b32.xlu0 %v356, 60
        %v1033 = vpop.permute.xlu0 %1032
        %1034 = vrot.lane.b32.xlu0 %v357, 60
        %v1035 = vpop.permute.xlu0 %1034
        %v1036 = vsel %vm768, %v1031, %v1033
        %v1037 = vsel %vm768, %v1033, %v1035
        %v1040 = vunpack.c.l.b16 %v975
        %v1041 = vunpack.c.h.b16 %v975
        %v1042 = vunpack.c.l.b16 %v976
        %v1043 = vpack.c.b16 %v1040, %v1040
        %v1044 = vpack.c.b16 %v1041, %v1041
        %v1045 = vpack.c.b16 %v1042, %v1042
        %1046 = vrot.lane.b32.xlu0 %v1043, 56
        %v1047 = vpop.permute.xlu0 %1046
        %1048 = vrot.lane.b32.xlu0 %v1044, 56
        %v1049 = vpop.permute.xlu0 %1048
        %1050 = vrot.lane.b32.xlu0 %v1045, 56
        %v1051 = vpop.permute.xlu0 %1050
        %vm1052 = vcmask 457728
        %v1053 = vsel %vm1052, %v1047, %v1049
        %v1054 = vsel %vm1052, %v1049, %v1051
        %v1057 = vunpack.c.l.b16 %v977
        %v1058 = vunpack.c.h.b16 %v977
        %v1059 = vunpack.c.l.b16 %v978
        %v1060 = vpack.c.b16 %v1057, %v1057
        %v1061 = vpack.c.b16 %v1058, %v1058
        %v1062 = vpack.c.b16 %v1059, %v1059
        %1063 = vrot.lane.b32.xlu0 %v355, 124
        %v1064 = vpop.permute.xlu0 %1063
        %1065 = vrot.lane.b32.xlu0 %v356, 124
        %v1066 = vpop.permute.xlu0 %1065
        %1067 = vrot.lane.b32.xlu0 %v357, 124
        %v1068 = vpop.permute.xlu0 %1067
        %v1069 = vsel %vm684, %v1064, %v1066
        %v1070 = vsel %vm684, %v1066, %v1068
        %v1073 = vunpack.c.l.b16 %v979
        %v1074 = vunpack.c.h.b16 %v979
        %v1075 = vunpack.c.l.b16 %v980
        %v1076 = vpack.c.b16 %v1073, %v1073
        %v1077 = vpack.c.b16 %v1074, %v1074
        %v1078 = vpack.c.b16 %v1075, %v1075
        %1079 = vrot.lane.b32.xlu0 %v1076, 120
        %v1080 = vpop.permute.xlu0 %1079
        %1081 = vrot.lane.b32.xlu0 %v1077, 120
        %v1082 = vpop.permute.xlu0 %1081
        %1083 = vrot.lane.b32.xlu0 %v1078, 120
        %v1084 = vpop.permute.xlu0 %1083
        %v1085 = vsel %vm1011, %v1080, %v1082
        %v1086 = vsel %vm1011, %v1082, %v1084
        %v1089 = vsel %vm427, %v986, %v995
        %v1092 = vsel %vm427, %v987, %v996
        %v1095 = vsel %vm427, %v988, %v994
        %v1098 = vsel %vm427, %v1012, %v1023
        %v1101 = vsel %vm427, %v1013, %v1028
        %v1104 = vsel %vm427, %v1010, %v1029
        %v1107 = vsel %vm427, %v1031, %v1047
        %v1110 = vsel %vm427, %v1036, %v1053
        %v1113 = vsel %vm427, %v1037, %v1054
        %v1116 = vsel %vm427, %v1060, %v1069
        %v1119 = vsel %vm427, %v1061, %v1070
        %v1122 = vsel %vm427, %v1062, %v1068
        %v1123 = vld [vmem:[%s1 + $0x8] sm:$0xf]
        %v1124 = vld [vmem:[%s2 + $0x10] sm:$0xff]
        %1126 = vset.pattern.permute.xlu0 0
        %1127 = vperm.xlu0 %1126, %v1124
        %v1128 = vpop.permute.xlu0 %1127
        %1142 = vrot.lane.b32.xlu0 %v1089, 60
        %v1143 = vpop.permute.xlu0 %1142
        %1144 = vrot.lane.b32.xlu0 %v1092, 60
        %v1145 = vpop.permute.xlu0 %1144
        %1146 = vrot.lane.b32.xlu0 %v1095, 60
        %v1147 = vpop.permute.xlu0 %1146
        %1148 = vrot.lane.b32.xlu0 %v1098, 60
        %v1149 = vpop.permute.xlu0 %1148
        %1150 = vrot.lane.b32.xlu0 %v1101, 60
        %v1151 = vpop.permute.xlu0 %1150
        %1152 = vrot.lane.b32.xlu0 %v1104, 60
        %v1153 = vpop.permute.xlu0 %1152
        %1154 = vrot.lane.b32.xlu0 %v1107, 60
        %v1155 = vpop.permute.xlu0 %1154
        %1156 = vrot.lane.b32.xlu0 %v1110, 60
        %v1157 = vpop.permute.xlu0 %1156
        %1158 = vrot.lane.b32.xlu0 %v1113, 60
        %v1159 = vpop.permute.xlu0 %1158
        %1160 = vrot.lane.b32.xlu0 %v1116, 60
        %v1161 = vpop.permute.xlu0 %1160
        %1162 = vrot.lane.b32.xlu0 %v1119, 60
        %v1163 = vpop.permute.xlu0 %1162
        %1164 = vrot.lane.b32.xlu0 %v1122, 60
        %v1165 = vpop.permute.xlu0 %1164
        %1166 = vrot.lane.b32.xlu0 %v1085, 60
        %v1167 = vpop.permute.xlu0 %1166
        %1168 = vrot.lane.b32.xlu0 %v1086, 60
        %v1169 = vpop.permute.xlu0 %1168
        %1170 = vrot.lane.b32.xlu0 %v1084, 60
        %v1171 = vpop.permute.xlu0 %1170
        %v1172 = vsel %vm768, %v1143, %v1145
        %v1173 = vsel %vm768, %v1145, %v1147
        %v1174 = vsel %vm768, %v1149, %v1151
        %v1175 = vsel %vm768, %v1151, %v1153
        %v1176 = vsel %vm768, %v1155, %v1157
        %v1177 = vsel %vm768, %v1157, %v1159
        %v1178 = vsel %vm768, %v1161, %v1163
        %v1179 = vsel %vm768, %v1163, %v1165
        %v1180 = vsel %vm768, %v1167, %v1169
        %v1181 = vsel %vm768, %v1169, %v1171
        %v1191 = vsel %vm531, %v1123, 0
        %v1194 = vsel %vm427, %v1180, 0
        %v1197 = vsel %vm427, %v1181, 0
        %1199 = vmatprep.subr.bf16.mxu0 %v1173
        %1200 = vmatpush1.bf16.msra.mxu0 %v1172
        %1201 = vmatprep.subr.bf16.mxu0 %v1175
        %1202 = vmatpush1.bf16.msra.mxu0 %v1174
        %1203 = vmatprep.subr.bf16.mxu0 %v1177
        %1204 = vmatpush1.bf16.msra.mxu0 %v1176
        %1205 = vmatprep.subr.bf16.mxu0 %v1179
        %1206 = vmatpush1.bf16.msra.mxu0 %v1178
        %1207 = vmatprep.subr.bf16.mxu0 %v1197
        %1208 = vmatpush1.bf16.msra.mxu0 %v1194
        %1209 = vmatprep.subr.bf16.mxu0 0
        %1210 = vmatpush1.bf16.msra.mxu0 0
        %1211 = vmatprep.subr.bf16.mxu0 0
        %1212 = vmatpush1.bf16.msra.mxu0 0
        %1213 = vmatprep.subr.bf16.mxu0 0
        %1214 = vmatpush1.bf16.msra.mxu0 0
        %1215 = vmatprep.subr.bf16.mxu0 0
        %1216 = vmatpush1.bf16.msra.mxu0 0
        %1217 = vmatprep.subr.bf16.mxu0 0
        %1218 = vmatpush1.bf16.msra.mxu0 0
        %1219 = vmatprep.subr.bf16.mxu0 0
        %1220 = vmatpush1.bf16.msra.mxu0 0
        %1221 = vmatprep.subr.bf16.mxu0 0
        %1222 = vmatpush1.bf16.msra.mxu0 0
        %1223 = vmatprep.subr.bf16.mxu0 0
        %1224 = vmatpush1.bf16.msra.mxu0 0
        %1225 = vmatprep.subr.bf16.mxu0 0
        %1226 = vmatpush1.bf16.msra.mxu0 0
        %1227 = vmatprep.subr.bf16.mxu0 0
        %1228 = vmatpush1.bf16.msra.mxu0 0
        %1229 = vmatprep.subr.bf16.mxu0 0
        %1230 = vmatpush1.bf16.msra.mxu0 0
        %1231 = vmatprep.mubr.bf16.mxu0 0
        %1232 = vmatmul.mubr.bf16.gmra.mrb[0].mxu0 %v1191
        %v1233 = vpop.f32.mrb[0].mxu0
        %v1234 = vadd.f32 %v1128, %v1233
        %v1235 = vpop.f32.mrb[0].mxu0
        %v1236 = vadd.f32 %v1128, %v1235
        %v1237 = vpop.f32.mrb[0].mxu0
        %v1238 = vpop.f32.mrb[0].mxu0
        %1239 = vdwg.mxu0
        %v1240 = vld [vmem:[%s164] sm:$0xff]
        %vm1241 = vcmp.ge.s32.totalorder %v215, 8
        %vm1242 = vcmp.ge.s32.totalorder %v216, 8
        %v1243 = vsel %vm1241, 1, 0
        %v1244 = vsel %vm1242, 1, 0
        %vm1245 = vcmp.eq.s32.totalorder %v1243, 1
        %vm1246 = vcmp.eq.s32.totalorder %v1244, 1
        %vm1247 = vmpackc.low %vm1246, %vm1245
        %v1248 = vsel %vm1247, %v1240, 0
        %vm1249 = vcmp.lt.s32.totalorder %v215, 8
        %vm1250 = vcmp.lt.s32.totalorder %v216, 8
        %v1251 = vsel %vm1249, 1, 0
        %v1252 = vsel %vm1250, 1, 0
        %vm1253 = vcmp.eq.s32.totalorder %v1251, 1
        %vm1254 = vcmp.eq.s32.totalorder %v1252, 1
        %vm1255 = vmpackc.low %vm1254, %vm1253
        %v1256 = vsel %vm1255, 65537, 0
        %1257 = vrot.lane.b32.xlu0 %v1256, 16
        %v1258 = vpop.permute.xlu0 %1257
        %v1259 = vrot.slane %v1258, 4
        %vm1260 = vcmask 130048
        %v1261 = vsel %vm1260, %v1259, %v1258
        %vm1262 = vcmp.ne.s16.totalorder %v1261, 0
        %vm1263 = vcmp.ne.s16.totalorder %v1259, 0
        %v1264 = vsel %vm1262, %v217, 0
        %v1265 = vsel %vm1263, %v218, 0
        %v1266 = vld [vmem:[%s164 + $0x4] sm:$0xff]
        %v1267 = vsel %vm1247, %v1266, 0
        %v1268 = vsel %vm1262, %v253, 0
        %v1269 = vsel %vm1263, %v254, 0
        %v1270 = vld [vmem:[%s164 + $0x8] sm:$0xff]
        %v1271 = vsel %vm1247, %v1270, 0
        %v1272 = vld [vmem:[%s164 + $0x10] sm:$0xf]
        %v1273 = vsel %vm1262, %v1270, 0
        %v1274 = vsel %vm1263, %v1272, 0
        %v1276 = vunpack.c.l.b16 %v1248
        %v1277 = vunpack.c.h.b16 %v1248
        %v1278 = vpack.c.b16 %v1276, %v1276
        %v1279 = vpack.c.b16 %v1277, %v1277
        %1280 = vrot.lane.b32.xlu0 %v304, 120
        %v1281 = vpop.permute.xlu0 %1280
        %1282 = vrot.lane.b32.xlu0 %v305, 120
        %v1283 = vpop.permute.xlu0 %1282
        %1284 = vrot.lane.b32.xlu0 %v306, 120
        %v1285 = vpop.permute.xlu0 %1284
        %v1286 = vsel %vm1011, %v1281, %v1283
        %v1287 = vsel %vm1011, %v1283, %v1285
        %v1290 = vunpack.c.l.b16 %v1264
        %v1291 = vunpack.c.h.b16 %v1264
        %v1292 = vunpack.c.l.b16 %v1265
        %v1293 = vpack.c.b16 %v1290, %v1290
        %v1294 = vpack.c.b16 %v1291, %v1291
        %v1295 = vpack.c.b16 %v1292, %v1292
        %1296 = vrot.lane.b32.xlu0 %v1293, 112
        %v1297 = vpop.permute.xlu0 %1296
        %1298 = vrot.lane.b32.xlu0 %v1294, 112
        %v1299 = vpop.permute.xlu0 %1298
        %1300 = vrot.lane.b32.xlu0 %v1295, 112
        %v1301 = vpop.permute.xlu0 %1300
        %v1302 = vsel %vm347, %v1297, %v1299
        %v1303 = vsel %vm347, %v1299, %v1301
        %v1305 = vunpack.c.l.b16 %v1267
        %v1306 = vunpack.c.h.b16 %v1267
        %v1307 = vpack.c.b16 %v1305, %v1305
        %v1308 = vpack.c.b16 %v1306, %v1306
        %1309 = vrot.lane.b32.xlu0 %v355, 120
        %v1310 = vpop.permute.xlu0 %1309
        %1311 = vrot.lane.b32.xlu0 %v356, 120
        %v1312 = vpop.permute.xlu0 %1311
        %1313 = vrot.lane.b32.xlu0 %v357, 120
        %v1314 = vpop.permute.xlu0 %1313
        %v1315 = vsel %vm1011, %v1310, %v1312
        %v1316 = vsel %vm1011, %v1312, %v1314
        %v1319 = vunpack.c.l.b16 %v1268
        %v1320 = vunpack.c.h.b16 %v1268
        %v1321 = vunpack.c.l.b16 %v1269
        %v1322 = vpack.c.b16 %v1319, %v1319
        %v1323 = vpack.c.b16 %v1320, %v1320
        %v1324 = vpack.c.b16 %v1321, %v1321
        %1325 = vrot.lane.b32.xlu0 %v1322, 112
        %v1326 = vpop.permute.xlu0 %1325
        %1327 = vrot.lane.b32.xlu0 %v1323, 112
        %v1328 = vpop.permute.xlu0 %1327
        %1329 = vrot.lane.b32.xlu0 %v1324, 112
        %v1330 = vpop.permute.xlu0 %1329
        %v1331 = vsel %vm347, %v1326, %v1328
        %v1332 = vsel %vm347, %v1328, %v1330
        %v1334 = vunpack.c.l.b16 %v1271
        %v1335 = vunpack.c.h.b16 %v1271
        %v1336 = vpack.c.b16 %v1334, %v1334
        %v1337 = vpack.c.b16 %v1335, %v1335
        %v1340 = vunpack.c.l.b16 %v1270
        %v1341 = vunpack.c.h.b16 %v1270
        %v1342 = vunpack.c.l.b16 %v1272
        %v1343 = vpack.c.b16 %v1340, %v1340
        %v1344 = vpack.c.b16 %v1341, %v1341
        %v1345 = vpack.c.b16 %v1342, %v1342
        %1346 = vrot.lane.b32.xlu0 %v1343, 120
        %v1347 = vpop.permute.xlu0 %1346
        %1348 = vrot.lane.b32.xlu0 %v1344, 120
        %v1349 = vpop.permute.xlu0 %1348
        %1350 = vrot.lane.b32.xlu0 %v1345, 120
        %v1351 = vpop.permute.xlu0 %1350
        %v1352 = vsel %vm1011, %v1347, %v1349
        %v1353 = vsel %vm1011, %v1349, %v1351
        %v1356 = vunpack.c.l.b16 %v1273
        %v1357 = vunpack.c.h.b16 %v1273
        %v1358 = vunpack.c.l.b16 %v1274
        %v1359 = vpack.c.b16 %v1356, %v1356
        %v1360 = vpack.c.b16 %v1357, %v1357
        %v1361 = vpack.c.b16 %v1358, %v1358
        %1362 = vrot.lane.b32.xlu0 %v1359, 112
        %v1363 = vpop.permute.xlu0 %1362
        %1364 = vrot.lane.b32.xlu0 %v1360, 112
        %v1365 = vpop.permute.xlu0 %1364
        %1366 = vrot.lane.b32.xlu0 %v1361, 112
        %v1367 = vpop.permute.xlu0 %1366
        %v1368 = vsel %vm347, %v1363, %v1365
        %v1369 = vsel %vm347, %v1365, %v1367
        %v1372 = vsel %vm427, %v1278, %v1286
        %v1376 = vsel %vm427, %v1279, %v1287
        %v1380 = vsel %vm427, %v1302, %v1307
        %v1384 = vsel %vm427, %v1303, %v1308
        %v1388 = vsel %vm427, %v1315, %v1331
        %v1392 = vsel %vm427, %v1316, %v1332
        %v1396 = vsel %vm427, %v1336, %v1352
        %v1400 = vsel %vm427, %v1337, %v1353
        %v1402 = vld [vmem:[%s1 + $0xc] sm:$0xf]
        %v1403 = vld [vmem:[%s2 + $0x18] sm:$0xff]
        %1405 = vset.pattern.permute.xlu0 0
        %1406 = vperm.xlu0 %1405, %v1403
        %v1407 = vpop.permute.xlu0 %1406
        %v1410 = vsel %vm531, %v1402, 0
        %v1413 = vsel %vm427, %v1368, 0
        %v1416 = vsel %vm427, %v1369, 0
        %1418 = vmatprep.subr.bf16.mxu0 %v1376
        %1419 = vmatpush1.bf16.msra.mxu0 %v1372
        %1420 = vmatprep.subr.bf16.mxu0 %v1384
        %1421 = vmatpush1.bf16.msra.mxu0 %v1380
        %1422 = vmatprep.subr.bf16.mxu0 %v1392
        %1423 = vmatpush1.bf16.msra.mxu0 %v1388
        %1424 = vmatprep.subr.bf16.mxu0 %v1400
        %1425 = vmatpush1.bf16.msra.mxu0 %v1396
        %1426 = vmatprep.subr.bf16.mxu0 %v1416
        %1427 = vmatpush1.bf16.msra.mxu0 %v1413
        %1428 = vmatprep.subr.bf16.mxu0 0
        %1429 = vmatpush1.bf16.msra.mxu0 0
        %1430 = vmatprep.subr.bf16.mxu0 0
        %1431 = vmatpush1.bf16.msra.mxu0 0
        %1432 = vmatprep.subr.bf16.mxu0 0
        %1433 = vmatpush1.bf16.msra.mxu0 0
        %1434 = vmatprep.subr.bf16.mxu0 0
        %1435 = vmatpush1.bf16.msra.mxu0 0
        %1436 = vmatprep.subr.bf16.mxu0 0
        %1437 = vmatpush1.bf16.msra.mxu0 0
        %1438 = vmatprep.subr.bf16.mxu0 0
        %1439 = vmatpush1.bf16.msra.mxu0 0
        %1440 = vmatprep.subr.bf16.mxu0 0
        %1441 = vmatpush1.bf16.msra.mxu0 0
        %1442 = vmatprep.subr.bf16.mxu0 0
        %1443 = vmatpush1.bf16.msra.mxu0 0
        %1444 = vmatprep.subr.bf16.mxu0 0
        %1445 = vmatpush1.bf16.msra.mxu0 0
        %1446 = vmatprep.subr.bf16.mxu0 0
        %1447 = vmatpush1.bf16.msra.mxu0 0
        %1448 = vmatprep.subr.bf16.mxu0 0
        %1449 = vmatpush1.bf16.msra.mxu0 0
        %1450 = vmatprep.mubr.bf16.mxu0 0
        %1451 = vmatmul.mubr.bf16.gmra.mrb[0].mxu0 %v1410
        %v1452 = vpop.f32.mrb[0].mxu0
        %v1453 = vadd.f32 %v1407, %v1452
        %v1454 = vpop.f32.mrb[0].mxu0
        %v1455 = vadd.f32 %v1407, %v1454
        %v1456 = vpop.f32.mrb[0].mxu0
        %v1457 = vpop.f32.mrb[0].mxu0
        %1458 = vdwg.mxu0
        %1459 = vst [vmem:[%s186] sm:$0xff] %v582
        %1460 = vst [vmem:[%s186 + $0x8] sm:$0xff] %v583
        %1461 = vst [vmem:[%s186 + $0x10] sm:$0xff] %v919
        %1462 = vst [vmem:[%s186 + $0x18] sm:$0xff] %v921
        %1463 = vst [vmem:[%s186 + $0x20] sm:$0xff] %v1234
        %1464 = vst [vmem:[%s186 + $0x28] sm:$0xff] %v1236
        %1465 = vst [vmem:[%s186 + $0x30] sm:$0xff] %v1453
        %1466 = vst [vmem:[%s186 + $0x38] sm:$0xff] %v1455
        %s1467 = sand.u32 %s96, 1
        %s1468 = scalar_lea.sflag [#allocation4], %s1467
        %s1469 = sand.u32 %s96, 1
        %s1470 = smul.addr %s1469, 64
        %s1471 = scalar_lea.vmem [#allocation5], %s1470
        // Predicated region
        $region37: #{tpu_custom_call.1} parent=31 // pred_check
          %p1472 = pneg %p106
        $region38: #{tpu_custom_call.1} parent=31 // pred_check_branch
          %1474 = sbr.rel (%p1472) target = $region40
        $region39: #{tpu_custom_call.1} parent=31 // pred_region
          %s1476 = ssub.s32 1024, 1024
          %1477 = vsyncadd %s1468, %s1476
          %s1478 = smul.addr %s20, 8
          %s1479 = smul.addr %s1478, 128
          %s1480 = scalar_lea.hbm %s3, %s1479
          %s1481 = sshll.u32 %s1471, 4
          %s1482 = int_to_ptr.vmem [resolvable:$true] %s1481
          %1487 = dma.vmem_to_hbm [thread:$0]  %s1482, 1024, %s1480, %s1468, 256, 256, 16
        $region40: #{tpu_custom_call.1} parent=31 // pred_fallthru
          _
      $region32: #{tpu_custom_call.1} parent=5 // pred_fallthru
        _
      %p1488 = scmp.le.s32.totalorder 2, %s15
      // Predicated region
      $region41: #{tpu_custom_call.1} parent=5 // pred_check
        %p1489 = pneg %p1488
      $region42: #{tpu_custom_call.1} parent=5 // pred_check_branch
        %1491 = sbr.rel (%p1489) target = $region44
      $region43: #{tpu_custom_call.1} parent=5 // pred_region
        %s1492 = ssub.s32 %s15, 2
        // Predicated region
        $region45: #{tpu_custom_call.1} parent=43 // pred_check
          %p1493 = pneg %p112
        $region46: #{tpu_custom_call.1} parent=43 // pred_check_branch
          %1495 = sbr.rel (%p1493) target = $region48
        $region47: #{tpu_custom_call.1} parent=43 // pred_region
          %s1496 = sand.u32 %s97, 1
          %s1497 = scalar_lea.sflag [#allocation4], %s1496
          %s1498 = sand.u32 %s97, 1
          %s1499 = smul.addr %s1498, 64
          %s1500 = scalar_lea.vmem [#allocation5], %s1499
          %1501 = dma.done %s1497, 1024
        $region48: #{tpu_custom_call.1} parent=43 // pred_fallthru
          _
      $region44: #{tpu_custom_call.1} parent=5 // pred_fallthru
        _
    $region6: #{tpu_custom_call.1} parent=1 // loop_footer
      %s19 = sadd.s32 1, %s15
    $region7: #{tpu_custom_call.1} parent=1 // loop_footer_branch
      %14 = sbr.rel target = $region3
    $region8: #{tpu_custom_call.1} parent=1 // loop_exit
      _
    %1502 = vsyncpa [#allocation3], 1
    %s1503 = scalar_lea.sflag [#allocation3], 1
    %1504 = vsyncpa %s1503, 1
    %1505 = vsyncpa [#allocation4], 1
    %s1506 = scalar_lea.sflag [#allocation4], 1
    %1507 = vsyncpa %s1506, 1

</llo_original>
